<compile_context>
chip_gen: v5e
topology: v5e:2x2
jax: 0.10.0
libtpu: 0.0.40
codegen_flags: <defaults>
</compile_context>

<pallas_src>
import functools

import jax
import jax.numpy as jnp
from jax.experimental import pallas as pl
from jax.experimental.pallas import tpu as pltpu

# ---- small synthetic BERT config (real model: H=768, 12 layers, 12 heads) ----
VOCAB = 128
MAX_POS = 64
HIDDEN = 32
N_HEADS = 2
HEAD_DIM = HIDDEN // N_HEADS
INTERMEDIATE = 64
N_LAYERS = 2
NUM_LABELS = 3           # O / B-Disease / I-Disease
LOGIT_PAD = 128          # lane-dense classifier output width (slice to 3 in wrapper)
LN_EPS = 1e-12


# ----------------------------- fused Pallas kernel -----------------------------
def _layernorm(x, g, b):
    mu = jnp.mean(x, axis=-1, keepdims=True)
    var = jnp.mean((x - mu) ** 2, axis=-1, keepdims=True)
    return (x - mu) * jax.lax.rsqrt(var + LN_EPS) * g + b


def bert_layer_kernel(
    x_ref,            # (B*S, H)   f32 embedding sum (pre-LN)
    mask_ref,         # (B, S)     f32 attention mask (1 = keep, 0 = pad)
    emb_g_ref,        # (1, H)
    emb_b_ref,        # (1, H)
    wqkv_ref,         # (1, H, 3H) bf16 fused q|k|v projection (scale folded into Wq)
    bqkv_ref,         # (1, 1, 3H) f32
    wo_ref,           # (1, H, H)  bf16
    bo_ref,           # (1, 1, H)
    ln1_g_ref,        # (1, 1, H)
    ln1_b_ref,        # (1, 1, H)
    w1_ref,           # (1, H, I)  bf16
    b1_ref,           # (1, 1, I)
    w2_ref,           # (1, I, H)  bf16
    b2_ref,           # (1, 1, H)
    ln2_g_ref,        # (1, 1, H)
    ln2_b_ref,        # (1, 1, H)
    cls_w_ref,        # (H, 128)   f32 zero-padded classifier weight (lane-dense)
    cls_b_ref,        # (1, 128)
    o_ref,            # (B*S, 128) padded logits (written at last layer only)
    x_scr,            # (B*S, H)   f32 VMEM residual stream, carried across layers
    *, batch, seq,
):
    l = pl.program_id(0)

    # ---- embedding LayerNorm only on the first grid step ----
    @pl.when(l == 0)
    def _():
        x_scr[...] = _layernorm(x_ref[...], emb_g_ref[...], emb_b_ref[...])

    x = x_scr[...]                                             # (B*S, H) f32

    # HF-style additive mask, built once per layer step, broadcast for all heads.
    add_mask = (1.0 - mask_ref[...]) * -1e4                    # (B, S)
    add_mask = jnp.broadcast_to(
        add_mask[:, None, None, :], (batch, N_HEADS, 1, seq)
    ).reshape(batch * N_HEADS, 1, seq)                         # (B*nH, 1, S)

    # ---- fused QKV projection: one bf16 MXU matmul, f32 accumulate ----
    qkv = (jnp.dot(x.astype(jnp.bfloat16), wqkv_ref[0],
                   preferred_element_type=jnp.float32) + bqkv_ref[0])   # (B*S, 3H)

    def to_heads(t):                                           # (B*S, H) -> (B*nH, S, dH)
        return (t.reshape(batch, seq, N_HEADS, HEAD_DIM)
                 .transpose(0, 2, 1, 3)
                 .reshape(batch * N_HEADS, seq, HEAD_DIM))

    q = to_heads(qkv[:, 0 * HIDDEN:1 * HIDDEN])
    k = to_heads(qkv[:, 1 * HIDDEN:2 * HIDDEN])
    v = to_heads(qkv[:, 2 * HIDDEN:3 * HIDDEN])

    # ---- multi-head attention: all batches & heads in one batched matmul pair ----
    s = jnp.einsum('bqd,bkd->bqk', q.astype(jnp.bfloat16), k.astype(jnp.bfloat16),
                   preferred_element_type=jnp.float32)         # (B*nH, S, S)
    s = s + add_mask
    s = s - jnp.max(s, axis=-1, keepdims=True)
    p = jnp.exp(s)
    p = p * pl.reciprocal(jnp.sum(p, axis=-1, keepdims=True), approx=True)
    ctx = jnp.einsum('bqk,bkd->bqd', p.astype(jnp.bfloat16), v.astype(jnp.bfloat16),
                     preferred_element_type=jnp.float32)       # (B*nH, S, dH)
    ctx = (ctx.reshape(batch, N_HEADS, seq, HEAD_DIM)
              .transpose(0, 2, 1, 3)
              .reshape(batch * seq, HIDDEN))

    # ---- attention output projection + residual + LN ----
    attn_out = (jnp.dot(ctx.astype(jnp.bfloat16), wo_ref[0],
                        preferred_element_type=jnp.float32) + bo_ref[0])
    x = _layernorm(attn_out + x, ln1_g_ref[0], ln1_b_ref[0])

    # ---- FFN + residual + LN ----
    h1 = (jnp.dot(x.astype(jnp.bfloat16), w1_ref[0],
                  preferred_element_type=jnp.float32) + b1_ref[0])
    # TODO(synk): HF BERT "gelu" is erf-based; tanh approximation kept for TPU lowering safety.
    h1 = jax.nn.gelu(h1, approximate=True)
    ffn_out = (jnp.dot(h1.astype(jnp.bfloat16), w2_ref[0],
                       preferred_element_type=jnp.float32) + b2_ref[0])
    x = _layernorm(ffn_out + x, ln2_g_ref[0], ln2_b_ref[0])

    x_scr[...] = x                                             # carry residual to next layer

    # ---- lane-dense classifier head on the last grid step ----
    @pl.when(l == pl.num_programs(0) - 1)
    def _():
        o_ref[...] = (jnp.dot(x, cls_w_ref[...],
                              preferred_element_type=jnp.float32) + cls_b_ref[...])


# -------------------------- parameters (synthetic) --------------------------
def init_params(key):
    keys = iter(jax.random.split(key, 64))

    def w(shape):
        return (0.02 * jax.random.normal(next(keys), shape)).astype(jnp.float32)

    def zeros(shape):
        return jnp.zeros(shape, jnp.float32)

    def ones(shape):
        return jnp.ones(shape, jnp.float32)

    scale = 1.0 / (HEAD_DIM ** 0.5)

    wqkv, bqkv, wo, bo = [], [], [], []
    ln1_g, ln1_b, w1, b1, w2, b2, ln2_g, ln2_b = [], [], [], [], [], [], [], []
    for _ in range(N_LAYERS):
        wq, wk, wv = w((HIDDEN, HIDDEN)), w((HIDDEN, HIDDEN)), w((HIDDEN, HIDDEN))
        # Fold the 1/sqrt(head_dim) attention scale into Wq (and bq, zero here).
        wqkv.append(jnp.concatenate([wq * scale, wk, wv], axis=1))   # (H, 3H)
        bq, bk, bv = zeros((1, HIDDEN)), zeros((1, HIDDEN)), zeros((1, HIDDEN))
        bqkv.append(jnp.concatenate([bq * scale, bk, bv], axis=1))   # (1, 3H)
        wo.append(w((HIDDEN, HIDDEN)))
        bo.append(zeros((1, HIDDEN)))
        ln1_g.append(ones((1, HIDDEN)))
        ln1_b.append(zeros((1, HIDDEN)))
        w1.append(w((HIDDEN, INTERMEDIATE)))
        b1.append(zeros((1, INTERMEDIATE)))
        w2.append(w((INTERMEDIATE, HIDDEN)))
        b2.append(zeros((1, HIDDEN)))
        ln2_g.append(ones((1, HIDDEN)))
        ln2_b.append(zeros((1, HIDDEN)))

    # Classifier padded to 128 output lanes (zero columns beyond NUM_LABELS).
    cls_w = w((HIDDEN, NUM_LABELS))
    cls_b = zeros((NUM_LABELS,))
    cls_w_pad = jnp.zeros((HIDDEN, LOGIT_PAD), jnp.float32).at[:, :NUM_LABELS].set(cls_w)
    cls_b_pad = jnp.zeros((1, LOGIT_PAD), jnp.float32).at[0, :NUM_LABELS].set(cls_b)

    return {
        "word_emb": w((VOCAB, HIDDEN)),
        "pos_emb": w((MAX_POS, HIDDEN)),
        "type_emb": w((2, HIDDEN)),
        "emb_ln_g": ones((1, HIDDEN)),
        "emb_ln_b": zeros((1, HIDDEN)),
        # Big matmul weights stored bf16 (halves DMA bytes, hits bf16 MXU path);
        # biases / LN params / classifier stay f32.
        "wqkv": jnp.stack(wqkv).astype(jnp.bfloat16),
        "bqkv": jnp.stack(bqkv),
        "wo": jnp.stack(wo).astype(jnp.bfloat16),
        "bo": jnp.stack(bo),
        "ln1_g": jnp.stack(ln1_g), "ln1_b": jnp.stack(ln1_b),
        "w1": jnp.stack(w1).astype(jnp.bfloat16), "b1": jnp.stack(b1),
        "w2": jnp.stack(w2).astype(jnp.bfloat16), "b2": jnp.stack(b2),
        "ln2_g": jnp.stack(ln2_g), "ln2_b": jnp.stack(ln2_b),
        "cls_w_pad": cls_w_pad, "cls_b_pad": cls_b_pad,
    }


# ------------------------------ forward pass -------------------------------
def forward(params, input_ids, attention_mask=None):
    B, S = input_ids.shape
    if attention_mask is None:
        attention_mask = jnp.ones((B, S), jnp.int32)

    # Embedding gather stays in plain JAX (glue); everything else is one kernel.
    # TODO(synk): could be moved in-kernel via scalar-prefetched ids + pl.Element gather.
    pos_ids = jnp.arange(S)
    x = (jnp.take(params["word_emb"], input_ids, axis=0)
         + params["pos_emb"][pos_ids][None, :, :]
         + params["type_emb"][0][None, None, :])
    x = x.reshape(B * S, HIDDEN).astype(jnp.float32)
    mask_f = attention_mask.astype(jnp.float32)

    kern = functools.partial(bert_layer_kernel, batch=B, seq=S)

    def resident(shape):                      # same block every layer -> stays in VMEM
        return pl.BlockSpec(shape, lambda l: (0,) * len(shape))

    def per_layer(d1, d2):                    # layer-indexed weight slab, streamed by layer
        return pl.BlockSpec((1, d1, d2), lambda l: (l, 0, 0))

    in_specs = [
        resident((B * S, HIDDEN)),            # x (embedding sum)
        resident((B, S)),                     # attention mask
        resident((1, HIDDEN)),                # emb LN gamma
        resident((1, HIDDEN)),                # emb LN beta
        per_layer(HIDDEN, 3 * HIDDEN),        # wqkv
        per_layer(1, 3 * HIDDEN),             # bqkv
        per_layer(HIDDEN, HIDDEN),            # wo
        per_layer(1, HIDDEN),                 # bo
        per_layer(1, HIDDEN),                 # ln1 gamma
        per_layer(1, HIDDEN),                 # ln1 beta
        per_layer(HIDDEN, INTERMEDIATE),      # w1
        per_layer(1, INTERMEDIATE),           # b1
        per_layer(INTERMEDIATE, HIDDEN),      # w2
        per_layer(1, HIDDEN),                 # b2
        per_layer(1, HIDDEN),                 # ln2 gamma
        per_layer(1, HIDDEN),                 # ln2 beta
        resident((HIDDEN, LOGIT_PAD)),        # classifier weight (padded)
        resident((1, LOGIT_PAD)),             # classifier bias (padded)
    ]
    out_spec = pl.BlockSpec((B * S, LOGIT_PAD), lambda l: (0, 0))

    # Advisory cost estimate for XLA scheduling around the custom call.
    flops = int(N_LAYERS * (2 * B * S * HIDDEN * (3 * HIDDEN + HIDDEN + 2 * INTERMEDIATE)
                            + 4 * B * S * S * HIDDEN)
                + 2 * B * S * HIDDEN * LOGIT_PAD)
    transcendentals = int(N_LAYERS * (B * N_HEADS * S * S + B * S * INTERMEDIATE))
    bytes_accessed = int(
        sum(int(a.size) * a.dtype.itemsize for a in
            [x, mask_f, params["wqkv"], params["bqkv"], params["wo"], params["bo"],
             params["w1"], params["b1"], params["w2"], params["b2"],
             params["ln1_g"], params["ln1_b"], params["ln2_g"], params["ln2_b"],
             params["cls_w_pad"], params["cls_b_pad"]])
        + B * S * LOGIT_PAD * 4)

    logits_pad = pl.pallas_call(
        kern,
        out_shape=jax.ShapeDtypeStruct((B * S, LOGIT_PAD), jnp.float32),
        grid_spec=pltpu.PrefetchScalarGridSpec(
            num_scalar_prefetch=0,
            grid=(N_LAYERS,),                 # layer axis: weights streamed per layer
            in_specs=in_specs,
            out_specs=out_spec,
            scratch_shapes=[pltpu.VMEM((B * S, HIDDEN), jnp.float32)],  # residual stream
        ),
        compiler_params=pltpu.CompilerParams(
            # TODO(synk): add a "parallel" batch/row-tile axis to use v7x's 2nd TensorCore.
            dimension_semantics=("arbitrary",),
            vmem_limit_bytes=32 * 1024 * 1024,
        ),
        cost_estimate=pl.CostEstimate(flops=flops,
                                      transcendentals=transcendentals,
                                      bytes_accessed=bytes_accessed),
    )(x, mask_f,
      params["emb_ln_g"], params["emb_ln_b"],
      params["wqkv"], params["bqkv"],
      params["wo"], params["bo"],
      params["ln1_g"], params["ln1_b"],
      params["w1"], params["b1"],
      params["w2"], params["b2"],
      params["ln2_g"], params["ln2_b"],
      params["cls_w_pad"], params["cls_b_pad"])

    logits = logits_pad[:, :NUM_LABELS].reshape(B, S, NUM_LABELS)
    # return_dict=False => tuple of (logits,)
    return (logits,)


if __name__ == "__main__":
    key = jax.random.PRNGKey(0)
    kp, kd = jax.random.split(key)
    params = init_params(kp)

    B, S = 2, 8
    data = jax.random.randint(kd, (B, S), 0, VOCAB, dtype=jnp.int32)
    attention_mask = jnp.array([[1, 1, 1, 1, 1, 1, 1, 1],
                                [1, 1, 1, 1, 1, 1, 0, 0]], dtype=jnp.int32)

    (logits,) = jax.jit(forward)(params, data, attention_mask)
    logits = jax.block_until_ready(logits)
    assert logits.shape == (B, S, NUM_LABELS)
    assert bool(jnp.all(jnp.isfinite(logits)))
    print("KERNEL_OK")
</pallas_src>

<mosaic_0001>
module attributes {stable_mosaic.version = 11 : i64} {
  func.func @bert_layer_kernel(%arg0: i32, %arg1: memref<16x32xf32, #tpu.memory_space<vmem>>, %arg2: memref<2x8xf32, #tpu.memory_space<vmem>>, %arg3: memref<1x32xf32, #tpu.memory_space<vmem>>, %arg4: memref<1x32xf32, #tpu.memory_space<vmem>>, %arg5: memref<1x32x96xbf16, #tpu.memory_space<vmem>>, %arg6: memref<1x1x96xf32, #tpu.memory_space<vmem>>, %arg7: memref<1x32x32xbf16, #tpu.memory_space<vmem>>, %arg8: memref<1x1x32xf32, #tpu.memory_space<vmem>>, %arg9: memref<1x1x32xf32, #tpu.memory_space<vmem>>, %arg10: memref<1x1x32xf32, #tpu.memory_space<vmem>>, %arg11: memref<1x32x64xbf16, #tpu.memory_space<vmem>>, %arg12: memref<1x1x64xf32, #tpu.memory_space<vmem>>, %arg13: memref<1x64x32xbf16, #tpu.memory_space<vmem>>, %arg14: memref<1x1x32xf32, #tpu.memory_space<vmem>>, %arg15: memref<1x1x32xf32, #tpu.memory_space<vmem>>, %arg16: memref<1x1x32xf32, #tpu.memory_space<vmem>>, %arg17: memref<32x128xf32, #tpu.memory_space<vmem>>, %arg18: memref<1x128xf32, #tpu.memory_space<vmem>>, %arg19: memref<16x128xf32, #tpu.memory_space<vmem>>, %arg20: memref<16x32xf32, #tpu.memory_space<vmem>>) attributes {dimension_semantics = [#tpu.dimension_semantics<arbitrary>], iteration_bounds = array<i64: 2>, scalar_prefetch = 0 : i64, scratch_operands = 1 : i64, tpu.core_type = #tpu.core_type<tc>, window_params = [{pipeline_mode = #tpu.pipeline_mode<synchronous>, transform_indices = @transform_0, window_bounds = array<i64: 16, 32>}, {pipeline_mode = #tpu.pipeline_mode<synchronous>, transform_indices = @transform_1, window_bounds = array<i64: 2, 8>}, {pipeline_mode = #tpu.pipeline_mode<synchronous>, transform_indices = @transform_2, window_bounds = array<i64: 1, 32>}, {pipeline_mode = #tpu.pipeline_mode<synchronous>, transform_indices = @transform_3, window_bounds = array<i64: 1, 32>}, {transform_indices = @transform_4, window_bounds = array<i64: 1, 32, 96>}, {transform_indices = @transform_5, window_bounds = array<i64: 1, 1, 96>}, {transform_indices = @transform_6, window_bounds = array<i64: 1, 32, 32>}, {transform_indices = @transform_7, window_bounds = array<i64: 1, 1, 32>}, {transform_indices = @transform_8, window_bounds = array<i64: 1, 1, 32>}, {transform_indices = @transform_9, window_bounds = array<i64: 1, 1, 32>}, {transform_indices = @transform_10, window_bounds = array<i64: 1, 32, 64>}, {transform_indices = @transform_11, window_bounds = array<i64: 1, 1, 64>}, {transform_indices = @transform_12, window_bounds = array<i64: 1, 64, 32>}, {transform_indices = @transform_13, window_bounds = array<i64: 1, 1, 32>}, {transform_indices = @transform_14, window_bounds = array<i64: 1, 1, 32>}, {transform_indices = @transform_15, window_bounds = array<i64: 1, 1, 32>}, {pipeline_mode = #tpu.pipeline_mode<synchronous>, transform_indices = @transform_16, window_bounds = array<i64: 32, 128>}, {pipeline_mode = #tpu.pipeline_mode<synchronous>, transform_indices = @transform_17, window_bounds = array<i64: 1, 128>}, {pipeline_mode = #tpu.pipeline_mode<synchronous>, transform_indices = @transform_18, window_bounds = array<i64: 16, 128>}]} {
    %c0_i32 = arith.constant 0 : i32
    %0 = arith.cmpi eq, %arg0, %c0_i32 : i32
    %1 = arith.extui %0 : i1 to i32
    %c0_i32_0 = arith.constant 0 : i32
    %2 = arith.cmpi ne, %1, %c0_i32_0 : i32
    scf.if %2 {
      %c0_66 = arith.constant 0 : index
      %c0_67 = arith.constant 0 : index
      %149 = vector.load %arg1[%c0_66, %c0_67] : memref<16x32xf32, #tpu.memory_space<vmem>>, vector<16x32xf32>
      %c0_68 = arith.constant 0 : index
      %c0_69 = arith.constant 0 : index
      %150 = vector.load %arg3[%c0_68, %c0_69] : memref<1x32xf32, #tpu.memory_space<vmem>>, vector<1x32xf32>
      %c0_70 = arith.constant 0 : index
      %c0_71 = arith.constant 0 : index
      %151 = vector.load %arg4[%c0_70, %c0_71] : memref<1x32xf32, #tpu.memory_space<vmem>>, vector<1x32xf32>
      %cst_72 = arith.constant dense<0.000000e+00> : vector<16xf32>
      %152 = vector.multi_reduction <add>, %149, %cst_72 [1] : vector<16x32xf32> to vector<16xf32>
      %153 = vector.shape_cast %152 : vector<16xf32> to vector<16x1xf32>
      %cst_73 = arith.constant 3.200000e+01 : f32
      %154 = vector.broadcast %cst_73 : f32 to vector<16x1xf32>
      %155 = arith.divf %153, %154 : vector<16x1xf32>
      %156 = vector.broadcast %155 : vector<16x1xf32> to vector<16x32xf32>
      %157 = arith.subf %149, %156 : vector<16x32xf32>
      %158 = arith.mulf %157, %157 : vector<16x32xf32>
      %cst_74 = arith.constant dense<0.000000e+00> : vector<16xf32>
      %159 = vector.multi_reduction <add>, %158, %cst_74 [1] : vector<16x32xf32> to vector<16xf32>
      %160 = vector.shape_cast %159 : vector<16xf32> to vector<16x1xf32>
      %cst_75 = arith.constant 3.200000e+01 : f32
      %161 = vector.broadcast %cst_75 : f32 to vector<16x1xf32>
      %162 = arith.divf %160, %161 : vector<16x1xf32>
      %163 = vector.broadcast %155 : vector<16x1xf32> to vector<16x32xf32>
      %164 = arith.subf %149, %163 : vector<16x32xf32>
      %cst_76 = arith.constant 9.99999996E-13 : f32
      %165 = vector.broadcast %cst_76 : f32 to vector<16x1xf32>
      %166 = arith.addf %162, %165 : vector<16x1xf32>
      %167 = math.rsqrt %166 : vector<16x1xf32>
      %168 = vector.broadcast %167 : vector<16x1xf32> to vector<16x32xf32>
      %169 = arith.mulf %164, %168 : vector<16x32xf32>
      %170 = vector.broadcast %150 : vector<1x32xf32> to vector<16x32xf32>
      %171 = arith.mulf %169, %170 : vector<16x32xf32>
      %172 = vector.broadcast %151 : vector<1x32xf32> to vector<16x32xf32>
      %173 = arith.addf %171, %172 : vector<16x32xf32>
      %c0_77 = arith.constant 0 : index
      %c0_78 = arith.constant 0 : index
      %174 = vector.load %arg20[%c0_77, %c0_78] : memref<16x32xf32, #tpu.memory_space<vmem>>, vector<16x32xf32>
      tpu.vector_store %arg20[%c0_77, %c0_78], %173 {strides = array<i32>} : memref<16x32xf32, #tpu.memory_space<vmem>>, vector<16x32xf32>,
    } else {
    }
    %c0 = arith.constant 0 : index
    %c0_1 = arith.constant 0 : index
    %3 = vector.load %arg20[%c0, %c0_1] : memref<16x32xf32, #tpu.memory_space<vmem>>, vector<16x32xf32>
    %c0_2 = arith.constant 0 : index
    %c0_3 = arith.constant 0 : index
    %4 = vector.load %arg2[%c0_2, %c0_3] : memref<2x8xf32, #tpu.memory_space<vmem>>, vector<2x8xf32>
    %cst = arith.constant 1.000000e+00 : f32
    %5 = vector.broadcast %cst : f32 to vector<2x8xf32>
    %6 = arith.subf %5, %4 : vector<2x8xf32>
    %cst_4 = arith.constant -1.000000e+04 : f32
    %7 = vector.broadcast %cst_4 : f32 to vector<2x8xf32>
    %8 = arith.mulf %6, %7 : vector<2x8xf32>
    %9 = vector.shape_cast %8 : vector<2x8xf32> to vector<2x1x1x8xf32>
    %10 = vector.shape_cast %9 : vector<2x1x1x8xf32> to vector<2x1x1x8xf32>
    %11 = vector.broadcast %10 : vector<2x1x1x8xf32> to vector<2x2x1x8xf32>
    %12 = vector.shape_cast %11 : vector<2x2x1x8xf32> to vector<4x1x8xf32>
    %13 = arith.truncf %3 : vector<16x32xf32> to vector<16x32xbf16>
    %c0_5 = arith.constant 0 : index
    %c0_6 = arith.constant 0 : index
    %c0_7 = arith.constant 0 : index
    %14 = vector.load %arg5[%c0_5, %c0_6, %c0_7] : memref<1x32x96xbf16, #tpu.memory_space<vmem>>, vector<1x32x96xbf16>
    %15 = vector.shape_cast %14 : vector<1x32x96xbf16> to vector<32x96xbf16>
    %cst_8 = arith.constant dense<0.000000e+00> : vector<16x96xf32>
    %16 = tpu.matmul %13, %15, %cst_8 {dimension_numbers = #tpu.dot_dimension_numbers<[1], [0], [0], [1], [0, 0, 1, 1], [], []>} : vector<16x32xbf16>, vector<32x96xbf16>, vector<16x96xf32> -> vector<16x96xf32>
    %c0_9 = arith.constant 0 : index
    %c0_10 = arith.constant 0 : index
    %c0_11 = arith.constant 0 : index
    %17 = vector.load %arg6[%c0_9, %c0_10, %c0_11] : memref<1x1x96xf32, #tpu.memory_space<vmem>>, vector<1x1x96xf32>
    %18 = vector.shape_cast %17 : vector<1x1x96xf32> to vector<1x96xf32>
    %19 = vector.broadcast %18 : vector<1x96xf32> to vector<16x96xf32>
    %20 = arith.addf %16, %19 : vector<16x96xf32>
    %21 = vector.extract_strided_slice %20 {offsets = [0, 0], sizes = [16, 32], strides = [1, 1]} : vector<16x96xf32> to vector<16x32xf32>
    %22 = vector.shape_cast %21 : vector<16x32xf32> to vector<2x8x2x16xf32>
    %23 = tpu.transpose %22, [0, 2, 1, 3] : vector<2x8x2x16xf32> -> vector<2x2x8x16xf32>
    %24 = vector.shape_cast %23 : vector<2x2x8x16xf32> to vector<4x8x16xf32>
    %25 = vector.extract_strided_slice %20 {offsets = [0, 32], sizes = [16, 32], strides = [1, 1]} : vector<16x96xf32> to vector<16x32xf32>
    %26 = vector.shape_cast %25 : vector<16x32xf32> to vector<2x8x2x16xf32>
    %27 = tpu.transpose %26, [0, 2, 1, 3] : vector<2x8x2x16xf32> -> vector<2x2x8x16xf32>
    %28 = vector.shape_cast %27 : vector<2x2x8x16xf32> to vector<4x8x16xf32>
    %29 = vector.extract_strided_slice %20 {offsets = [0, 64], sizes = [16, 32], strides = [1, 1]} : vector<16x96xf32> to vector<16x32xf32>
    %30 = vector.shape_cast %29 : vector<16x32xf32> to vector<2x8x2x16xf32>
    %31 = tpu.transpose %30, [0, 2, 1, 3] : vector<2x8x2x16xf32> -> vector<2x2x8x16xf32>
    %32 = vector.shape_cast %31 : vector<2x2x8x16xf32> to vector<4x8x16xf32>
    %33 = arith.truncf %24 : vector<4x8x16xf32> to vector<4x8x16xbf16>
    %34 = arith.truncf %28 : vector<4x8x16xf32> to vector<4x8x16xbf16>
    "tpu.trace_start"() <{level = 10 : i32, message = "bqd,bkd->bqk"}> : () -> ()
    %cst_12 = arith.constant dense<0.000000e+00> : vector<4x8x8xf32>
    %35 = tpu.matmul %33, %34, %cst_12 {dimension_numbers = #tpu.dot_dimension_numbers<[2], [2], [1], [1], [0, 0, 0, 1, 1, 1], [0], [0]>} : vector<4x8x16xbf16>, vector<4x8x16xbf16>, vector<4x8x8xf32> -> vector<4x8x8xf32>
    "tpu.trace_stop"() : () -> ()
    %36 = vector.broadcast %12 : vector<4x1x8xf32> to vector<4x8x8xf32>
    %37 = arith.addf %35, %36 : vector<4x8x8xf32>
    %cst_13 = arith.constant dense<0xFF800000> : vector<4x8xf32>
    %38 = vector.multi_reduction <maximumf>, %37, %cst_13 [2] : vector<4x8x8xf32> to vector<4x8xf32>
    %39 = vector.shape_cast %38 : vector<4x8xf32> to vector<4x8x1xf32>
    %40 = vector.broadcast %39 : vector<4x8x1xf32> to vector<4x8x8xf32>
    %41 = arith.subf %37, %40 : vector<4x8x8xf32>
    %42 = math.exp %41 : vector<4x8x8xf32>
    %cst_14 = arith.constant dense<0.000000e+00> : vector<4x8xf32>
    %43 = vector.multi_reduction <add>, %42, %cst_14 [2] : vector<4x8x8xf32> to vector<4x8xf32>
    %44 = vector.shape_cast %43 : vector<4x8xf32> to vector<4x8x1xf32>
    %45 = tpu.reciprocal %44 {approx = true} : vector<4x8x1xf32> -> vector<4x8x1xf32>
    %46 = vector.broadcast %45 : vector<4x8x1xf32> to vector<4x8x8xf32>
    %47 = arith.mulf %42, %46 : vector<4x8x8xf32>
    %48 = arith.truncf %47 : vector<4x8x8xf32> to vector<4x8x8xbf16>
    %49 = arith.truncf %32 : vector<4x8x16xf32> to vector<4x8x16xbf16>
    "tpu.trace_start"() <{level = 10 : i32, message = "bqk,bkd->bqd"}> : () -> ()
    %cst_15 = arith.constant dense<0.000000e+00> : vector<4x8x16xf32>
    %50 = tpu.matmul %48, %49, %cst_15 {dimension_numbers = #tpu.dot_dimension_numbers<[2], [1], [1], [2], [0, 0, 0, 1, 1, 2], [0], [0]>} : vector<4x8x8xbf16>, vector<4x8x16xbf16>, vector<4x8x16xf32> -> vector<4x8x16xf32>
    "tpu.trace_stop"() : () -> ()
    %51 = vector.shape_cast %50 : vector<4x8x16xf32> to vector<2x2x8x16xf32>
    %52 = tpu.transpose %51, [0, 2, 1, 3] : vector<2x2x8x16xf32> -> vector<2x8x2x16xf32>
    %53 = vector.shape_cast %52 : vector<2x8x2x16xf32> to vector<16x32xf32>
    %54 = arith.truncf %53 : vector<16x32xf32> to vector<16x32xbf16>
    %c0_16 = arith.constant 0 : index
    %c0_17 = arith.constant 0 : index
    %c0_18 = arith.constant 0 : index
    %55 = vector.load %arg7[%c0_16, %c0_17, %c0_18] : memref<1x32x32xbf16, #tpu.memory_space<vmem>>, vector<1x32x32xbf16>
    %56 = vector.shape_cast %55 : vector<1x32x32xbf16> to vector<32x32xbf16>
    %cst_19 = arith.constant dense<0.000000e+00> : vector<16x32xf32>
    %57 = tpu.matmul %54, %56, %cst_19 {dimension_numbers = #tpu.dot_dimension_numbers<[1], [0], [0], [1], [0, 0, 1, 1], [], []>} : vector<16x32xbf16>, vector<32x32xbf16>, vector<16x32xf32> -> vector<16x32xf32>
    %c0_20 = arith.constant 0 : index
    %c0_21 = arith.constant 0 : index
    %c0_22 = arith.constant 0 : index
    %58 = vector.load %arg8[%c0_20, %c0_21, %c0_22] : memref<1x1x32xf32, #tpu.memory_space<vmem>>, vector<1x1x32xf32>
    %59 = vector.shape_cast %58 : vector<1x1x32xf32> to vector<1x32xf32>
    %60 = vector.broadcast %59 : vector<1x32xf32> to vector<16x32xf32>
    %61 = arith.addf %57, %60 : vector<16x32xf32>
    %62 = arith.addf %61, %3 : vector<16x32xf32>
    %c0_23 = arith.constant 0 : index
    %c0_24 = arith.constant 0 : index
    %c0_25 = arith.constant 0 : index
    %63 = vector.load %arg9[%c0_23, %c0_24, %c0_25] : memref<1x1x32xf32, #tpu.memory_space<vmem>>, vector<1x1x32xf32>
    %64 = vector.shape_cast %63 : vector<1x1x32xf32> to vector<1x32xf32>
    %c0_26 = arith.constant 0 : index
    %c0_27 = arith.constant 0 : index
    %c0_28 = arith.constant 0 : index
    %65 = vector.load %arg10[%c0_26, %c0_27, %c0_28] : memref<1x1x32xf32, #tpu.memory_space<vmem>>, vector<1x1x32xf32>
    %66 = vector.shape_cast %65 : vector<1x1x32xf32> to vector<1x32xf32>
    %cst_29 = arith.constant dense<0.000000e+00> : vector<16xf32>
    %67 = vector.multi_reduction <add>, %62, %cst_29 [1] : vector<16x32xf32> to vector<16xf32>
    %68 = vector.shape_cast %67 : vector<16xf32> to vector<16x1xf32>
    %cst_30 = arith.constant 3.200000e+01 : f32
    %69 = vector.broadcast %cst_30 : f32 to vector<16x1xf32>
    %70 = arith.divf %68, %69 : vector<16x1xf32>
    %71 = vector.broadcast %70 : vector<16x1xf32> to vector<16x32xf32>
    %72 = arith.subf %62, %71 : vector<16x32xf32>
    %73 = arith.mulf %72, %72 : vector<16x32xf32>
    %cst_31 = arith.constant dense<0.000000e+00> : vector<16xf32>
    %74 = vector.multi_reduction <add>, %73, %cst_31 [1] : vector<16x32xf32> to vector<16xf32>
    %75 = vector.shape_cast %74 : vector<16xf32> to vector<16x1xf32>
    %cst_32 = arith.constant 3.200000e+01 : f32
    %76 = vector.broadcast %cst_32 : f32 to vector<16x1xf32>
    %77 = arith.divf %75, %76 : vector<16x1xf32>
    %78 = vector.broadcast %70 : vector<16x1xf32> to vector<16x32xf32>
    %79 = arith.subf %62, %78 : vector<16x32xf32>
    %cst_33 = arith.constant 9.99999996E-13 : f32
    %80 = vector.broadcast %cst_33 : f32 to vector<16x1xf32>
    %81 = arith.addf %77, %80 : vector<16x1xf32>
    %82 = math.rsqrt %81 : vector<16x1xf32>
    %83 = vector.broadcast %82 : vector<16x1xf32> to vector<16x32xf32>
    %84 = arith.mulf %79, %83 : vector<16x32xf32>
    %85 = vector.broadcast %64 : vector<1x32xf32> to vector<16x32xf32>
    %86 = arith.mulf %84, %85 : vector<16x32xf32>
    %87 = vector.broadcast %66 : vector<1x32xf32> to vector<16x32xf32>
    %88 = arith.addf %86, %87 : vector<16x32xf32>
    %89 = arith.truncf %88 : vector<16x32xf32> to vector<16x32xbf16>
    %c0_34 = arith.constant 0 : index
    %c0_35 = arith.constant 0 : index
    %c0_36 = arith.constant 0 : index
    %90 = vector.load %arg11[%c0_34, %c0_35, %c0_36] : memref<1x32x64xbf16, #tpu.memory_space<vmem>>, vector<1x32x64xbf16>
    %91 = vector.shape_cast %90 : vector<1x32x64xbf16> to vector<32x64xbf16>
    %cst_37 = arith.constant dense<0.000000e+00> : vector<16x64xf32>
    %92 = tpu.matmul %89, %91, %cst_37 {dimension_numbers = #tpu.dot_dimension_numbers<[1], [0], [0], [1], [0, 0, 1, 1], [], []>} : vector<16x32xbf16>, vector<32x64xbf16>, vector<16x64xf32> -> vector<16x64xf32>
    %c0_38 = arith.constant 0 : index
    %c0_39 = arith.constant 0 : index
    %c0_40 = arith.constant 0 : index
    %93 = vector.load %arg12[%c0_38, %c0_39, %c0_40] : memref<1x1x64xf32, #tpu.memory_space<vmem>>, vector<1x1x64xf32>
    %94 = vector.shape_cast %93 : vector<1x1x64xf32> to vector<1x64xf32>
    %95 = vector.broadcast %94 : vector<1x64xf32> to vector<16x64xf32>
    %96 = arith.addf %92, %95 : vector<16x64xf32>
    %97 = arith.mulf %96, %96 : vector<16x64xf32>
    %98 = arith.mulf %96, %97 : vector<16x64xf32>
    %cst_41 = arith.constant 4.471500e-02 : f32
    %99 = vector.broadcast %cst_41 : f32 to vector<16x64xf32>
    %100 = arith.mulf %99, %98 : vector<16x64xf32>
    %101 = arith.addf %96, %100 : vector<16x64xf32>
    %cst_42 = arith.constant 0.797884583 : f32
    %102 = vector.broadcast %cst_42 : f32 to vector<16x64xf32>
    %103 = arith.mulf %102, %101 : vector<16x64xf32>
    %104 = math.tanh %103 : vector<16x64xf32>
    %cst_43 = arith.constant 1.000000e+00 : f32
    %105 = vector.broadcast %cst_43 : f32 to vector<16x64xf32>
    %106 = arith.addf %105, %104 : vector<16x64xf32>
    %cst_44 = arith.constant 5.000000e-01 : f32
    %107 = vector.broadcast %cst_44 : f32 to vector<16x64xf32>
    %108 = arith.mulf %107, %106 : vector<16x64xf32>
    %109 = arith.mulf %96, %108 : vector<16x64xf32>
    %110 = arith.truncf %109 : vector<16x64xf32> to vector<16x64xbf16>
    %c0_45 = arith.constant 0 : index
    %c0_46 = arith.constant 0 : index
    %c0_47 = arith.constant 0 : index
    %111 = vector.load %arg13[%c0_45, %c0_46, %c0_47] : memref<1x64x32xbf16, #tpu.memory_space<vmem>>, vector<1x64x32xbf16>
    %112 = vector.shape_cast %111 : vector<1x64x32xbf16> to vector<64x32xbf16>
    %cst_48 = arith.constant dense<0.000000e+00> : vector<16x32xf32>
    %113 = tpu.matmul %110, %112, %cst_48 {dimension_numbers = #tpu.dot_dimension_numbers<[1], [0], [0], [1], [0, 0, 1, 1], [], []>} : vector<16x64xbf16>, vector<64x32xbf16>, vector<16x32xf32> -> vector<16x32xf32>
    %c0_49 = arith.constant 0 : index
    %c0_50 = arith.constant 0 : index
    %c0_51 = arith.constant 0 : index
    %114 = vector.load %arg14[%c0_49, %c0_50, %c0_51] : memref<1x1x32xf32, #tpu.memory_space<vmem>>, vector<1x1x32xf32>
    %115 = vector.shape_cast %114 : vector<1x1x32xf32> to vector<1x32xf32>
    %116 = vector.broadcast %115 : vector<1x32xf32> to vector<16x32xf32>
    %117 = arith.addf %113, %116 : vector<16x32xf32>
    %118 = arith.addf %117, %88 : vector<16x32xf32>
    %c0_52 = arith.constant 0 : index
    %c0_53 = arith.constant 0 : index
    %c0_54 = arith.constant 0 : index
    %119 = vector.load %arg15[%c0_52, %c0_53, %c0_54] : memref<1x1x32xf32, #tpu.memory_space<vmem>>, vector<1x1x32xf32>
    %120 = vector.shape_cast %119 : vector<1x1x32xf32> to vector<1x32xf32>
    %c0_55 = arith.constant 0 : index
    %c0_56 = arith.constant 0 : index
    %c0_57 = arith.constant 0 : index
    %121 = vector.load %arg16[%c0_55, %c0_56, %c0_57] : memref<1x1x32xf32, #tpu.memory_space<vmem>>, vector<1x1x32xf32>
    %122 = vector.shape_cast %121 : vector<1x1x32xf32> to vector<1x32xf32>
    %cst_58 = arith.constant dense<0.000000e+00> : vector<16xf32>
    %123 = vector.multi_reduction <add>, %118, %cst_58 [1] : vector<16x32xf32> to vector<16xf32>
    %124 = vector.shape_cast %123 : vector<16xf32> to vector<16x1xf32>
    %cst_59 = arith.constant 3.200000e+01 : f32
    %125 = vector.broadcast %cst_59 : f32 to vector<16x1xf32>
    %126 = arith.divf %124, %125 : vector<16x1xf32>
    %127 = vector.broadcast %126 : vector<16x1xf32> to vector<16x32xf32>
    %128 = arith.subf %118, %127 : vector<16x32xf32>
    %129 = arith.mulf %128, %128 : vector<16x32xf32>
    %cst_60 = arith.constant dense<0.000000e+00> : vector<16xf32>
    %130 = vector.multi_reduction <add>, %129, %cst_60 [1] : vector<16x32xf32> to vector<16xf32>
    %131 = vector.shape_cast %130 : vector<16xf32> to vector<16x1xf32>
    %cst_61 = arith.constant 3.200000e+01 : f32
    %132 = vector.broadcast %cst_61 : f32 to vector<16x1xf32>
    %133 = arith.divf %131, %132 : vector<16x1xf32>
    %134 = vector.broadcast %126 : vector<16x1xf32> to vector<16x32xf32>
    %135 = arith.subf %118, %134 : vector<16x32xf32>
    %cst_62 = arith.constant 9.99999996E-13 : f32
    %136 = vector.broadcast %cst_62 : f32 to vector<16x1xf32>
    %137 = arith.addf %133, %136 : vector<16x1xf32>
    %138 = math.rsqrt %137 : vector<16x1xf32>
    %139 = vector.broadcast %138 : vector<16x1xf32> to vector<16x32xf32>
    %140 = arith.mulf %135, %139 : vector<16x32xf32>
    %141 = vector.broadcast %120 : vector<1x32xf32> to vector<16x32xf32>
    %142 = arith.mulf %140, %141 : vector<16x32xf32>
    %143 = vector.broadcast %122 : vector<1x32xf32> to vector<16x32xf32>
    %144 = arith.addf %142, %143 : vector<16x32xf32>
    %c0_63 = arith.constant 0 : index
    %c0_64 = arith.constant 0 : index
    %145 = vector.load %arg20[%c0_63, %c0_64] : memref<16x32xf32, #tpu.memory_space<vmem>>, vector<16x32xf32>
    tpu.vector_store %arg20[%c0_63, %c0_64], %144 {strides = array<i32>} : memref<16x32xf32, #tpu.memory_space<vmem>>, vector<16x32xf32>,
    %c1_i32 = arith.constant 1 : i32
    %146 = arith.cmpi eq, %arg0, %c1_i32 : i32
    %147 = arith.extui %146 : i1 to i32
    %c0_i32_65 = arith.constant 0 : i32
    %148 = arith.cmpi ne, %147, %c0_i32_65 : i32
    scf.if %148 {
      %c0_66 = arith.constant 0 : index
      %c0_67 = arith.constant 0 : index
      %149 = vector.load %arg17[%c0_66, %c0_67] : memref<32x128xf32, #tpu.memory_space<vmem>>, vector<32x128xf32>
      %cst_68 = arith.constant dense<0.000000e+00> : vector<16x128xf32>
      %150 = tpu.matmul %144, %149, %cst_68 {dimension_numbers = #tpu.dot_dimension_numbers<[1], [0], [0], [1], [0, 0, 1, 1], [], []>} : vector<16x32xf32>, vector<32x128xf32>, vector<16x128xf32> -> vector<16x128xf32>
      %c0_69 = arith.constant 0 : index
      %c0_70 = arith.constant 0 : index
      %151 = vector.load %arg18[%c0_69, %c0_70] : memref<1x128xf32, #tpu.memory_space<vmem>>, vector<1x128xf32>
      %152 = vector.broadcast %151 : vector<1x128xf32> to vector<16x128xf32>
      %153 = arith.addf %150, %152 : vector<16x128xf32>
      %c0_71 = arith.constant 0 : index
      %c0_72 = arith.constant 0 : index
      %154 = vector.load %arg19[%c0_71, %c0_72] : memref<16x128xf32, #tpu.memory_space<vmem>>, vector<16x128xf32>
      tpu.vector_store %arg19[%c0_71, %c0_72], %153 {strides = array<i32>} : memref<16x128xf32, #tpu.memory_space<vmem>>, vector<16x128xf32>,
    } else {
    }
    return
  }
  func.func @transform_0(%arg0: i32) -> (i32, i32) {
    %c0_i32 = arith.constant 0 : i32
    %c0_i32_0 = arith.constant 0 : i32
    %c0_i32_1 = arith.constant 0 : i32
    return %c0_i32, %c0_i32_0 : i32, i32
  }
  func.func @transform_1(%arg0: i32) -> (i32, i32) {
    %c0_i32 = arith.constant 0 : i32
    %c0_i32_0 = arith.constant 0 : i32
    %c0_i32_1 = arith.constant 0 : i32
    return %c0_i32, %c0_i32_0 : i32, i32
  }
  func.func @transform_2(%arg0: i32) -> (i32, i32) {
    %c0_i32 = arith.constant 0 : i32
    %c0_i32_0 = arith.constant 0 : i32
    %c0_i32_1 = arith.constant 0 : i32
    return %c0_i32, %c0_i32_0 : i32, i32
  }
  func.func @transform_3(%arg0: i32) -> (i32, i32) {
    %c0_i32 = arith.constant 0 : i32
    %c0_i32_0 = arith.constant 0 : i32
    %c0_i32_1 = arith.constant 0 : i32
    return %c0_i32, %c0_i32_0 : i32, i32
  }
  func.func @transform_4(%arg0: i32) -> (i32, i32, i32) {
    %c0_i32 = arith.constant 0 : i32
    %c0_i32_0 = arith.constant 0 : i32
    %c0_i32_1 = arith.constant 0 : i32
    return %arg0, %c0_i32, %c0_i32_0 : i32, i32, i32
  }
  func.func @transform_5(%arg0: i32) -> (i32, i32, i32) {
    %c0_i32 = arith.constant 0 : i32
    %c0_i32_0 = arith.constant 0 : i32
    %c0_i32_1 = arith.constant 0 : i32
    return %arg0, %c0_i32, %c0_i32_0 : i32, i32, i32
  }
  func.func @transform_6(%arg0: i32) -> (i32, i32, i32) {
    %c0_i32 = arith.constant 0 : i32
    %c0_i32_0 = arith.constant 0 : i32
    %c0_i32_1 = arith.constant 0 : i32
    return %arg0, %c0_i32, %c0_i32_0 : i32, i32, i32
  }
  func.func @transform_7(%arg0: i32) -> (i32, i32, i32) {
    %c0_i32 = arith.constant 0 : i32
    %c0_i32_0 = arith.constant 0 : i32
    %c0_i32_1 = arith.constant 0 : i32
    return %arg0, %c0_i32, %c0_i32_0 : i32, i32, i32
  }
  func.func @transform_8(%arg0: i32) -> (i32, i32, i32) {
    %c0_i32 = arith.constant 0 : i32
    %c0_i32_0 = arith.constant 0 : i32
    %c0_i32_1 = arith.constant 0 : i32
    return %arg0, %c0_i32, %c0_i32_0 : i32, i32, i32
  }
  func.func @transform_9(%arg0: i32) -> (i32, i32, i32) {
    %c0_i32 = arith.constant 0 : i32
    %c0_i32_0 = arith.constant 0 : i32
    %c0_i32_1 = arith.constant 0 : i32
    return %arg0, %c0_i32, %c0_i32_0 : i32, i32, i32
  }
  func.func @transform_10(%arg0: i32) -> (i32, i32, i32) {
    %c0_i32 = arith.constant 0 : i32
    %c0_i32_0 = arith.constant 0 : i32
    %c0_i32_1 = arith.constant 0 : i32
    return %arg0, %c0_i32, %c0_i32_0 : i32, i32, i32
  }
  func.func @transform_11(%arg0: i32) -> (i32, i32, i32) {
    %c0_i32 = arith.constant 0 : i32
    %c0_i32_0 = arith.constant 0 : i32
    %c0_i32_1 = arith.constant 0 : i32
    return %arg0, %c0_i32, %c0_i32_0 : i32, i32, i32
  }
  func.func @transform_12(%arg0: i32) -> (i32, i32, i32) {
    %c0_i32 = arith.constant 0 : i32
    %c0_i32_0 = arith.constant 0 : i32
    %c0_i32_1 = arith.constant 0 : i32
    return %arg0, %c0_i32, %c0_i32_0 : i32, i32, i32
  }
  func.func @transform_13(%arg0: i32) -> (i32, i32, i32) {
    %c0_i32 = arith.constant 0 : i32
    %c0_i32_0 = arith.constant 0 : i32
    %c0_i32_1 = arith.constant 0 : i32
    return %arg0, %c0_i32, %c0_i32_0 : i32, i32, i32
  }
  func.func @transform_14(%arg0: i32) -> (i32, i32, i32) {
    %c0_i32 = arith.constant 0 : i32
    %c0_i32_0 = arith.constant 0 : i32
    %c0_i32_1 = arith.constant 0 : i32
    return %arg0, %c0_i32, %c0_i32_0 : i32, i32, i32
  }
  func.func @transform_15(%arg0: i32) -> (i32, i32, i32) {
    %c0_i32 = arith.constant 0 : i32
    %c0_i32_0 = arith.constant 0 : i32
    %c0_i32_1 = arith.constant 0 : i32
    return %arg0, %c0_i32, %c0_i32_0 : i32, i32, i32
  }
  func.func @transform_16(%arg0: i32) -> (i32, i32) {
    %c0_i32 = arith.constant 0 : i32
    %c0_i32_0 = arith.constant 0 : i32
    %c0_i32_1 = arith.constant 0 : i32
    return %c0_i32, %c0_i32_0 : i32, i32
  }
  func.func @transform_17(%arg0: i32) -> (i32, i32) {
    %c0_i32 = arith.constant 0 : i32
    %c0_i32_0 = arith.constant 0 : i32
    %c0_i32_1 = arith.constant 0 : i32
    return %c0_i32, %c0_i32_0 : i32, i32
  }
  func.func @transform_18(%arg0: i32) -> (i32, i32) {
    %c0_i32 = arith.constant 0 : i32
    %c0_i32_0 = arith.constant 0 : i32
    %c0_i32_1 = arith.constant 0 : i32
    return %c0_i32, %c0_i32_0 : i32, i32
  }
}

</mosaic_0001>

<llo_original>
// kernel: forward.1
$region0: #{forward.1}
  #allocation0 [shape = 'u32[]', space=smem, size = 0x4, offset = 0x4, fixed_abs, tag = 'smem constant byte address 0x4 - core index']
  #allocation1 [shape = 'u32[72,128]{1,0:T(1,128)}', space=vmem, size = 0x9000, scoped, tag = 'internal scratch']
  #allocation2 [shape = 'f32[16,32]{1,0:T(8,128)}', space=vmem, size = 0x2000, scoped, tag = 'scratch operand']
  %s0 = inlined_call_operand.vmem [shape: f32[16,32], index: 0, kind: input, shape index: {}]
  %s1 = inlined_call_operand.vmem [shape: f32[2,8], index: 1, kind: input, shape index: {}]
  %s2 = inlined_call_operand.vmem [shape: f32[1,32], index: 2, kind: input, shape index: {}]
  %s3 = inlined_call_operand.vmem [shape: f32[1,32], index: 3, kind: input, shape index: {}]
  %s4 = inlined_call_operand.vmem [shape: bf16[2,32,96], index: 4, kind: input, shape index: {}]
  %s5 = inlined_call_operand.vmem [shape: f32[2,1,96], index: 5, kind: input, shape index: {}]
  %s6 = inlined_call_operand.vmem [shape: bf16[2,32,32], index: 6, kind: input, shape index: {}]
  %s7 = inlined_call_operand.vmem [shape: f32[2,1,32], index: 7, kind: input, shape index: {}]
  %s8 = inlined_call_operand.vmem [shape: f32[2,1,32], index: 8, kind: input, shape index: {}]
  %s9 = inlined_call_operand.vmem [shape: f32[2,1,32], index: 9, kind: input, shape index: {}]
  %s10 = inlined_call_operand.vmem [shape: bf16[2,32,64], index: 10, kind: input, shape index: {}]
  %s11 = inlined_call_operand.vmem [shape: f32[2,1,64], index: 11, kind: input, shape index: {}]
  %s12 = inlined_call_operand.vmem [shape: bf16[2,64,32], index: 12, kind: input, shape index: {}]
  %s13 = inlined_call_operand.vmem [shape: f32[2,1,32], index: 13, kind: input, shape index: {}]
  %s14 = inlined_call_operand.vmem [shape: f32[2,1,32], index: 14, kind: input, shape index: {}]
  %s15 = inlined_call_operand.vmem [shape: f32[2,1,32], index: 15, kind: input, shape index: {}]
  %s16 = inlined_call_operand.vmem [shape: f32[32,128], index: 16, kind: input, shape index: {}]
  %s17 = inlined_call_operand.vmem [shape: f32[1,128], index: 17, kind: input, shape index: {}]
  %s18 = inlined_call_operand.vmem [shape: f32[16,128], index: 18, kind: output, shape index: {}]
  %s19 = sld [smem:[#allocation0]]
  $region113: #{forward.1} parent=0
    _
  %s21 = ssub.s32 1, %s19
  %s22 = scalar_select 0, %s21, %s19
  loop: start=0, step=1, limit=4
  $region2: #{forward.1} parent=0 // loop_pre_header
    _
  $region3: #{forward.1} parent=0 // loop_header
    %s24 = sphi 0, %s28
    %p25 = scmp.ge.s32.totalorder %s24, 4
    %s32 = sphi 0, %s32
    %s34 = sphi 0, %s32
    %s35 = sphi 0, %s34
    %s49 = sphi 0, %s35
    %s53 = sphi 0, %s53
    %s55 = sphi 0, %s53
    %s56 = sphi 0, %s55
    %s70 = sphi 0, %s56
    %s74 = sphi 0, %s74
    %s76 = sphi 0, %s74
    %s77 = sphi 0, %s76
    %s91 = sphi 0, %s77
    %s95 = sphi 0, %s95
    %s97 = sphi 0, %s95
    %s98 = sphi 0, %s97
    %s112 = sphi 0, %s98
    %s118 = sphi 0, %s120
    %s121 = sphi 0, %s118
    %s122 = sphi 0, %s121
    %s138 = sphi 0, %s122
    %s144 = sphi 0, %s146
    %s147 = sphi 0, %s144
    %s148 = sphi 0, %s147
    %s164 = sphi 0, %s148
    %s170 = sphi 0, %s172
    %s173 = sphi 0, %s170
    %s174 = sphi 0, %s173
    %s190 = sphi 0, %s174
    %s196 = sphi 0, %s198
    %s199 = sphi 0, %s196
    %s200 = sphi 0, %s199
    %s216 = sphi 0, %s200
    %s222 = sphi 0, %s224
    %s225 = sphi 0, %s222
    %s226 = sphi 0, %s225
    %s242 = sphi 0, %s226
    %s248 = sphi 0, %s250
    %s251 = sphi 0, %s248
    %s252 = sphi 0, %s251
    %s268 = sphi 0, %s252
    %s274 = sphi 0, %s276
    %s277 = sphi 0, %s274
    %s278 = sphi 0, %s277
    %s294 = sphi 0, %s278
    %s300 = sphi 0, %s302
    %s303 = sphi 0, %s300
    %s304 = sphi 0, %s303
    %s320 = sphi 0, %s304
    %s326 = sphi 0, %s328
    %s329 = sphi 0, %s326
    %s330 = sphi 0, %s329
    %s346 = sphi 0, %s330
    %s352 = sphi 0, %s354
    %s355 = sphi 0, %s352
    %s356 = sphi 0, %s355
    %s372 = sphi 0, %s356
    %s378 = sphi 0, %s380
    %s381 = sphi 0, %s378
    %s382 = sphi 0, %s381
    %s398 = sphi 0, %s382
    %s404 = sphi 0, %s406
    %s407 = sphi 0, %s404
    %s408 = sphi 0, %s407
    %s424 = sphi 0, %s408
    %s428 = sphi 0, %s428
    %s430 = sphi 0, %s428
    %s431 = sphi 0, %s430
    %s445 = sphi 0, %s431
    %s449 = sphi 0, %s449
    %s451 = sphi 0, %s449
    %s452 = sphi 0, %s451
    %s466 = sphi 0, %s452
    %s470 = sphi 0, %s470
    %s472 = sphi 0, %s470
    %s473 = sphi 0, %s472
    %s487 = sphi 0, %s473
  $region4: #{forward.1} parent=0 // loop_header_branch
    %27 = sbr.rel (%p25) target = $region8
  $region5: #{forward.1} parent=0 // loop_body
    %s29 = ssub.s32 %s24, 1
    %s30 = ssub.s32 %s24, 2
    %s31 = sadd.s32 %s24, 1
    %s33 = sadd.s32 %s32, 1
    %p36 = scmp.eq.s32.totalorder %s24, 1
    %p37 = scmp.ne.s32.totalorder %s32, %s34
    %p38 = scmp.eq.s32.totalorder %s24, 0
    %p39 = por %p37, %p38
    %p40 = scmp.ne.s32.totalorder %s32, %s34
    %p41 = scmp.eq.s32.totalorder %s29, 1
    %p42 = por %p40, %p41
    %p43 = scmp.ne.s32.totalorder %s34, %s35
    %p44 = scmp.eq.s32.totalorder %s29, 0
    %p45 = por %p43, %p44
    %p46 = scmp.ne.s32.totalorder %s34, %s35
    %p47 = scmp.eq.s32.totalorder %s30, 1
    %p48 = por %p46, %p47
    %p50 = scmp.ne.s32.totalorder %s35, %s49
    %p51 = scmp.eq.s32.totalorder %s30, 0
    %p52 = por %p50, %p51
    %s54 = sadd.s32 %s53, 1
    %p57 = scmp.eq.s32.totalorder %s24, 1
    %p58 = scmp.ne.s32.totalorder %s53, %s55
    %p59 = scmp.eq.s32.totalorder %s24, 0
    %p60 = por %p58, %p59
    %p61 = scmp.ne.s32.totalorder %s53, %s55
    %p62 = scmp.eq.s32.totalorder %s29, 1
    %p63 = por %p61, %p62
    %p64 = scmp.ne.s32.totalorder %s55, %s56
    %p65 = scmp.eq.s32.totalorder %s29, 0
    %p66 = por %p64, %p65
    %p67 = scmp.ne.s32.totalorder %s55, %s56
    %p68 = scmp.eq.s32.totalorder %s30, 1
    %p69 = por %p67, %p68
    %p71 = scmp.ne.s32.totalorder %s56, %s70
    %p72 = scmp.eq.s32.totalorder %s30, 0
    %p73 = por %p71, %p72
    %s75 = sadd.s32 %s74, 1
    %p78 = scmp.eq.s32.totalorder %s24, 1
    %p79 = scmp.ne.s32.totalorder %s74, %s76
    %p80 = scmp.eq.s32.totalorder %s24, 0
    %p81 = por %p79, %p80
    %p82 = scmp.ne.s32.totalorder %s74, %s76
    %p83 = scmp.eq.s32.totalorder %s29, 1
    %p84 = por %p82, %p83
    %p85 = scmp.ne.s32.totalorder %s76, %s77
    %p86 = scmp.eq.s32.totalorder %s29, 0
    %p87 = por %p85, %p86
    %p88 = scmp.ne.s32.totalorder %s76, %s77
    %p89 = scmp.eq.s32.totalorder %s30, 1
    %p90 = por %p88, %p89
    %p92 = scmp.ne.s32.totalorder %s77, %s91
    %p93 = scmp.eq.s32.totalorder %s30, 0
    %p94 = por %p92, %p93
    %s96 = sadd.s32 %s95, 1
    %p99 = scmp.eq.s32.totalorder %s24, 1
    %p100 = scmp.ne.s32.totalorder %s95, %s97
    %p101 = scmp.eq.s32.totalorder %s24, 0
    %p102 = por %p100, %p101
    %p103 = scmp.ne.s32.totalorder %s95, %s97
    %p104 = scmp.eq.s32.totalorder %s29, 1
    %p105 = por %p103, %p104
    %p106 = scmp.ne.s32.totalorder %s97, %s98
    %p107 = scmp.eq.s32.totalorder %s29, 0
    %p108 = por %p106, %p107
    %p109 = scmp.ne.s32.totalorder %s97, %s98
    %p110 = scmp.eq.s32.totalorder %s30, 1
    %p111 = por %p109, %p110
    %p113 = scmp.ne.s32.totalorder %s98, %s112
    %p114 = scmp.eq.s32.totalorder %s30, 0
    %p115 = por %p113, %p114
    %s116 = ssub.s32 %s24, %s31
    %p117 = scmp.eq.s32.totalorder %s116, 0
    %s119 = sadd.s32 %s118, 1
    %s120 = scalar_select %p117, %s118, %s119
    %p123 = pneg %p117
    %p124 = scmp.eq.s32.totalorder %s24, 1
    %p125 = por %p123, %p124
    %p126 = scmp.ne.s32.totalorder %s118, %s121
    %p127 = scmp.eq.s32.totalorder %s24, 0
    %p128 = por %p126, %p127
    %p129 = scmp.ne.s32.totalorder %s118, %s121
    %p130 = scmp.eq.s32.totalorder %s29, 1
    %p131 = por %p129, %p130
    %p132 = scmp.ne.s32.totalorder %s121, %s122
    %p133 = scmp.eq.s32.totalorder %s29, 0
    %p134 = por %p132, %p133
    %p135 = scmp.ne.s32.totalorder %s121, %s122
    %p136 = scmp.eq.s32.totalorder %s30, 1
    %p137 = por %p135, %p136
    %p139 = scmp.ne.s32.totalorder %s122, %s138
    %p140 = scmp.eq.s32.totalorder %s30, 0
    %p141 = por %p139, %p140
    %s142 = ssub.s32 %s24, %s31
    %p143 = scmp.eq.s32.totalorder %s142, 0
    %s145 = sadd.s32 %s144, 1
    %s146 = scalar_select %p143, %s144, %s145
    %p149 = pneg %p143
    %p150 = scmp.eq.s32.totalorder %s24, 1
    %p151 = por %p149, %p150
    %p152 = scmp.ne.s32.totalorder %s144, %s147
    %p153 = scmp.eq.s32.totalorder %s24, 0
    %p154 = por %p152, %p153
    %p155 = scmp.ne.s32.totalorder %s144, %s147
    %p156 = scmp.eq.s32.totalorder %s29, 1
    %p157 = por %p155, %p156
    %p158 = scmp.ne.s32.totalorder %s147, %s148
    %p159 = scmp.eq.s32.totalorder %s29, 0
    %p160 = por %p158, %p159
    %p161 = scmp.ne.s32.totalorder %s147, %s148
    %p162 = scmp.eq.s32.totalorder %s30, 1
    %p163 = por %p161, %p162
    %p165 = scmp.ne.s32.totalorder %s148, %s164
    %p166 = scmp.eq.s32.totalorder %s30, 0
    %p167 = por %p165, %p166
    %s168 = ssub.s32 %s24, %s31
    %p169 = scmp.eq.s32.totalorder %s168, 0
    %s171 = sadd.s32 %s170, 1
    %s172 = scalar_select %p169, %s170, %s171
    %p175 = pneg %p169
    %p176 = scmp.eq.s32.totalorder %s24, 1
    %p177 = por %p175, %p176
    %p178 = scmp.ne.s32.totalorder %s170, %s173
    %p179 = scmp.eq.s32.totalorder %s24, 0
    %p180 = por %p178, %p179
    %p181 = scmp.ne.s32.totalorder %s170, %s173
    %p182 = scmp.eq.s32.totalorder %s29, 1
    %p183 = por %p181, %p182
    %p184 = scmp.ne.s32.totalorder %s173, %s174
    %p185 = scmp.eq.s32.totalorder %s29, 0
    %p186 = por %p184, %p185
    %p187 = scmp.ne.s32.totalorder %s173, %s174
    %p188 = scmp.eq.s32.totalorder %s30, 1
    %p189 = por %p187, %p188
    %p191 = scmp.ne.s32.totalorder %s174, %s190
    %p192 = scmp.eq.s32.totalorder %s30, 0
    %p193 = por %p191, %p192
    %s194 = ssub.s32 %s24, %s31
    %p195 = scmp.eq.s32.totalorder %s194, 0
    %s197 = sadd.s32 %s196, 1
    %s198 = scalar_select %p195, %s196, %s197
    %p201 = pneg %p195
    %p202 = scmp.eq.s32.totalorder %s24, 1
    %p203 = por %p201, %p202
    %p204 = scmp.ne.s32.totalorder %s196, %s199
    %p205 = scmp.eq.s32.totalorder %s24, 0
    %p206 = por %p204, %p205
    %p207 = scmp.ne.s32.totalorder %s196, %s199
    %p208 = scmp.eq.s32.totalorder %s29, 1
    %p209 = por %p207, %p208
    %p210 = scmp.ne.s32.totalorder %s199, %s200
    %p211 = scmp.eq.s32.totalorder %s29, 0
    %p212 = por %p210, %p211
    %p213 = scmp.ne.s32.totalorder %s199, %s200
    %p214 = scmp.eq.s32.totalorder %s30, 1
    %p215 = por %p213, %p214
    %p217 = scmp.ne.s32.totalorder %s200, %s216
    %p218 = scmp.eq.s32.totalorder %s30, 0
    %p219 = por %p217, %p218
    %s220 = ssub.s32 %s24, %s31
    %p221 = scmp.eq.s32.totalorder %s220, 0
    %s223 = sadd.s32 %s222, 1
    %s224 = scalar_select %p221, %s222, %s223
    %p227 = pneg %p221
    %p228 = scmp.eq.s32.totalorder %s24, 1
    %p229 = por %p227, %p228
    %p230 = scmp.ne.s32.totalorder %s222, %s225
    %p231 = scmp.eq.s32.totalorder %s24, 0
    %p232 = por %p230, %p231
    %p233 = scmp.ne.s32.totalorder %s222, %s225
    %p234 = scmp.eq.s32.totalorder %s29, 1
    %p235 = por %p233, %p234
    %p236 = scmp.ne.s32.totalorder %s225, %s226
    %p237 = scmp.eq.s32.totalorder %s29, 0
    %p238 = por %p236, %p237
    %p239 = scmp.ne.s32.totalorder %s225, %s226
    %p240 = scmp.eq.s32.totalorder %s30, 1
    %p241 = por %p239, %p240
    %p243 = scmp.ne.s32.totalorder %s226, %s242
    %p244 = scmp.eq.s32.totalorder %s30, 0
    %p245 = por %p243, %p244
    %s246 = ssub.s32 %s24, %s31
    %p247 = scmp.eq.s32.totalorder %s246, 0
    %s249 = sadd.s32 %s248, 1
    %s250 = scalar_select %p247, %s248, %s249
    %p253 = pneg %p247
    %p254 = scmp.eq.s32.totalorder %s24, 1
    %p255 = por %p253, %p254
    %p256 = scmp.ne.s32.totalorder %s248, %s251
    %p257 = scmp.eq.s32.totalorder %s24, 0
    %p258 = por %p256, %p257
    %p259 = scmp.ne.s32.totalorder %s248, %s251
    %p260 = scmp.eq.s32.totalorder %s29, 1
    %p261 = por %p259, %p260
    %p262 = scmp.ne.s32.totalorder %s251, %s252
    %p263 = scmp.eq.s32.totalorder %s29, 0
    %p264 = por %p262, %p263
    %p265 = scmp.ne.s32.totalorder %s251, %s252
    %p266 = scmp.eq.s32.totalorder %s30, 1
    %p267 = por %p265, %p266
    %p269 = scmp.ne.s32.totalorder %s252, %s268
    %p270 = scmp.eq.s32.totalorder %s30, 0
    %p271 = por %p269, %p270
    %s272 = ssub.s32 %s24, %s31
    %p273 = scmp.eq.s32.totalorder %s272, 0
    %s275 = sadd.s32 %s274, 1
    %s276 = scalar_select %p273, %s274, %s275
    %p279 = pneg %p273
    %p280 = scmp.eq.s32.totalorder %s24, 1
    %p281 = por %p279, %p280
    %p282 = scmp.ne.s32.totalorder %s274, %s277
    %p283 = scmp.eq.s32.totalorder %s24, 0
    %p284 = por %p282, %p283
    %p285 = scmp.ne.s32.totalorder %s274, %s277
    %p286 = scmp.eq.s32.totalorder %s29, 1
    %p287 = por %p285, %p286
    %p288 = scmp.ne.s32.totalorder %s277, %s278
    %p289 = scmp.eq.s32.totalorder %s29, 0
    %p290 = por %p288, %p289
    %p291 = scmp.ne.s32.totalorder %s277, %s278
    %p292 = scmp.eq.s32.totalorder %s30, 1
    %p293 = por %p291, %p292
    %p295 = scmp.ne.s32.totalorder %s278, %s294
    %p296 = scmp.eq.s32.totalorder %s30, 0
    %p297 = por %p295, %p296
    %s298 = ssub.s32 %s24, %s31
    %p299 = scmp.eq.s32.totalorder %s298, 0
    %s301 = sadd.s32 %s300, 1
    %s302 = scalar_select %p299, %s300, %s301
    %p305 = pneg %p299
    %p306 = scmp.eq.s32.totalorder %s24, 1
    %p307 = por %p305, %p306
    %p308 = scmp.ne.s32.totalorder %s300, %s303
    %p309 = scmp.eq.s32.totalorder %s24, 0
    %p310 = por %p308, %p309
    %p311 = scmp.ne.s32.totalorder %s300, %s303
    %p312 = scmp.eq.s32.totalorder %s29, 1
    %p313 = por %p311, %p312
    %p314 = scmp.ne.s32.totalorder %s303, %s304
    %p315 = scmp.eq.s32.totalorder %s29, 0
    %p316 = por %p314, %p315
    %p317 = scmp.ne.s32.totalorder %s303, %s304
    %p318 = scmp.eq.s32.totalorder %s30, 1
    %p319 = por %p317, %p318
    %p321 = scmp.ne.s32.totalorder %s304, %s320
    %p322 = scmp.eq.s32.totalorder %s30, 0
    %p323 = por %p321, %p322
    %s324 = ssub.s32 %s24, %s31
    %p325 = scmp.eq.s32.totalorder %s324, 0
    %s327 = sadd.s32 %s326, 1
    %s328 = scalar_select %p325, %s326, %s327
    %p331 = pneg %p325
    %p332 = scmp.eq.s32.totalorder %s24, 1
    %p333 = por %p331, %p332
    %p334 = scmp.ne.s32.totalorder %s326, %s329
    %p335 = scmp.eq.s32.totalorder %s24, 0
    %p336 = por %p334, %p335
    %p337 = scmp.ne.s32.totalorder %s326, %s329
    %p338 = scmp.eq.s32.totalorder %s29, 1
    %p339 = por %p337, %p338
    %p340 = scmp.ne.s32.totalorder %s329, %s330
    %p341 = scmp.eq.s32.totalorder %s29, 0
    %p342 = por %p340, %p341
    %p343 = scmp.ne.s32.totalorder %s329, %s330
    %p344 = scmp.eq.s32.totalorder %s30, 1
    %p345 = por %p343, %p344
    %p347 = scmp.ne.s32.totalorder %s330, %s346
    %p348 = scmp.eq.s32.totalorder %s30, 0
    %p349 = por %p347, %p348
    %s350 = ssub.s32 %s24, %s31
    %p351 = scmp.eq.s32.totalorder %s350, 0
    %s353 = sadd.s32 %s352, 1
    %s354 = scalar_select %p351, %s352, %s353
    %p357 = pneg %p351
    %p358 = scmp.eq.s32.totalorder %s24, 1
    %p359 = por %p357, %p358
    %p360 = scmp.ne.s32.totalorder %s352, %s355
    %p361 = scmp.eq.s32.totalorder %s24, 0
    %p362 = por %p360, %p361
    %p363 = scmp.ne.s32.totalorder %s352, %s355
    %p364 = scmp.eq.s32.totalorder %s29, 1
    %p365 = por %p363, %p364
    %p366 = scmp.ne.s32.totalorder %s355, %s356
    %p367 = scmp.eq.s32.totalorder %s29, 0
    %p368 = por %p366, %p367
    %p369 = scmp.ne.s32.totalorder %s355, %s356
    %p370 = scmp.eq.s32.totalorder %s30, 1
    %p371 = por %p369, %p370
    %p373 = scmp.ne.s32.totalorder %s356, %s372
    %p374 = scmp.eq.s32.totalorder %s30, 0
    %p375 = por %p373, %p374
    %s376 = ssub.s32 %s24, %s31
    %p377 = scmp.eq.s32.totalorder %s376, 0
    %s379 = sadd.s32 %s378, 1
    %s380 = scalar_select %p377, %s378, %s379
    %p383 = pneg %p377
    %p384 = scmp.eq.s32.totalorder %s24, 1
    %p385 = por %p383, %p384
    %p386 = scmp.ne.s32.totalorder %s378, %s381
    %p387 = scmp.eq.s32.totalorder %s24, 0
    %p388 = por %p386, %p387
    %p389 = scmp.ne.s32.totalorder %s378, %s381
    %p390 = scmp.eq.s32.totalorder %s29, 1
    %p391 = por %p389, %p390
    %p392 = scmp.ne.s32.totalorder %s381, %s382
    %p393 = scmp.eq.s32.totalorder %s29, 0
    %p394 = por %p392, %p393
    %p395 = scmp.ne.s32.totalorder %s381, %s382
    %p396 = scmp.eq.s32.totalorder %s30, 1
    %p397 = por %p395, %p396
    %p399 = scmp.ne.s32.totalorder %s382, %s398
    %p400 = scmp.eq.s32.totalorder %s30, 0
    %p401 = por %p399, %p400
    %s402 = ssub.s32 %s24, %s31
    %p403 = scmp.eq.s32.totalorder %s402, 0
    %s405 = sadd.s32 %s404, 1
    %s406 = scalar_select %p403, %s404, %s405
    %p409 = pneg %p403
    %p410 = scmp.eq.s32.totalorder %s24, 1
    %p411 = por %p409, %p410
    %p412 = scmp.ne.s32.totalorder %s404, %s407
    %p413 = scmp.eq.s32.totalorder %s24, 0
    %p414 = por %p412, %p413
    %p415 = scmp.ne.s32.totalorder %s404, %s407
    %p416 = scmp.eq.s32.totalorder %s29, 1
    %p417 = por %p415, %p416
    %p418 = scmp.ne.s32.totalorder %s407, %s408
    %p419 = scmp.eq.s32.totalorder %s29, 0
    %p420 = por %p418, %p419
    %p421 = scmp.ne.s32.totalorder %s407, %s408
    %p422 = scmp.eq.s32.totalorder %s30, 1
    %p423 = por %p421, %p422
    %p425 = scmp.ne.s32.totalorder %s408, %s424
    %p426 = scmp.eq.s32.totalorder %s30, 0
    %p427 = por %p425, %p426
    %s429 = sadd.s32 %s428, 1
    %p432 = scmp.eq.s32.totalorder %s24, 1
    %p433 = scmp.ne.s32.totalorder %s428, %s430
    %p434 = scmp.eq.s32.totalorder %s24, 0
    %p435 = por %p433, %p434
    %p436 = scmp.ne.s32.totalorder %s428, %s430
    %p437 = scmp.eq.s32.totalorder %s29, 1
    %p438 = por %p436, %p437
    %p439 = scmp.ne.s32.totalorder %s430, %s431
    %p440 = scmp.eq.s32.totalorder %s29, 0
    %p441 = por %p439, %p440
    %p442 = scmp.ne.s32.totalorder %s430, %s431
    %p443 = scmp.eq.s32.totalorder %s30, 1
    %p444 = por %p442, %p443
    %p446 = scmp.ne.s32.totalorder %s431, %s445
    %p447 = scmp.eq.s32.totalorder %s30, 0
    %p448 = por %p446, %p447
    %s450 = sadd.s32 %s449, 1
    %p453 = scmp.eq.s32.totalorder %s24, 1
    %p454 = scmp.ne.s32.totalorder %s449, %s451
    %p455 = scmp.eq.s32.totalorder %s24, 0
    %p456 = por %p454, %p455
    %p457 = scmp.ne.s32.totalorder %s449, %s451
    %p458 = scmp.eq.s32.totalorder %s29, 1
    %p459 = por %p457, %p458
    %p460 = scmp.ne.s32.totalorder %s451, %s452
    %p461 = scmp.eq.s32.totalorder %s29, 0
    %p462 = por %p460, %p461
    %p463 = scmp.ne.s32.totalorder %s451, %s452
    %p464 = scmp.eq.s32.totalorder %s30, 1
    %p465 = por %p463, %p464
    %p467 = scmp.ne.s32.totalorder %s452, %s466
    %p468 = scmp.eq.s32.totalorder %s30, 0
    %p469 = por %p467, %p468
    %s471 = sadd.s32 %s470, 1
    %p474 = scmp.eq.s32.totalorder %s24, 1
    %p475 = scmp.ne.s32.totalorder %s470, %s472
    %p476 = scmp.eq.s32.totalorder %s24, 0
    %p477 = por %p475, %p476
    %p478 = scmp.ne.s32.totalorder %s470, %s472
    %p479 = scmp.eq.s32.totalorder %s29, 1
    %p480 = por %p478, %p479
    %p481 = scmp.ne.s32.totalorder %s472, %s473
    %p482 = scmp.eq.s32.totalorder %s29, 0
    %p483 = por %p481, %p482
    %p484 = scmp.ne.s32.totalorder %s472, %s473
    %p485 = scmp.eq.s32.totalorder %s30, 1
    %p486 = por %p484, %p485
    %p488 = scmp.ne.s32.totalorder %s473, %s487
    %p489 = scmp.eq.s32.totalorder %s30, 0
    %p490 = por %p488, %p489
    %p491 = scmp.le.s32.totalorder 1, %s24
    %p492 = scmp.lt.s32.totalorder %s24, 3
    %p493 = pnand %p491, %p492
    %p494 = pneg %p493
    // Predicated region
    $region9: #{forward.1} parent=5 // pred_check
      _
    $region10: #{forward.1} parent=5 // pred_check_branch
      %496 = sbr.rel (%p493) target = $region12
    $region11: #{forward.1} parent=5 // pred_region
      %s497 = ssub.s32 %s24, 1
      // Predicated region
      $region13: #{forward.1} parent=11 // pred_check
        %p498 = pneg %p45
      $region14: #{forward.1} parent=11 // pred_check_branch
        %500 = sbr.rel (%p498) target = $region16
      $region15: #{forward.1} parent=11 // pred_region
        _
      $region16: #{forward.1} parent=11 // pred_fallthru
        _
      // Predicated region
      $region17: #{forward.1} parent=11 // pred_check
        %p501 = pneg %p66
      $region18: #{forward.1} parent=11 // pred_check_branch
        %503 = sbr.rel (%p501) target = $region20
      $region19: #{forward.1} parent=11 // pred_region
        _
      $region20: #{forward.1} parent=11 // pred_fallthru
        _
      // Predicated region
      $region21: #{forward.1} parent=11 // pred_check
        %p504 = pneg %p87
      $region22: #{forward.1} parent=11 // pred_check_branch
        %506 = sbr.rel (%p504) target = $region24
      $region23: #{forward.1} parent=11 // pred_region
        _
      $region24: #{forward.1} parent=11 // pred_fallthru
        _
      // Predicated region
      $region25: #{forward.1} parent=11 // pred_check
        %p507 = pneg %p108
      $region26: #{forward.1} parent=11 // pred_check_branch
        %509 = sbr.rel (%p507) target = $region28
      $region27: #{forward.1} parent=11 // pred_region
        _
      $region28: #{forward.1} parent=11 // pred_fallthru
        _
      // Predicated region
      $region29: #{forward.1} parent=11 // pred_check
        %p510 = pneg %p441
      $region30: #{forward.1} parent=11 // pred_check_branch
        %512 = sbr.rel (%p510) target = $region32
      $region31: #{forward.1} parent=11 // pred_region
        _
      $region32: #{forward.1} parent=11 // pred_fallthru
        _
      // Predicated region
      $region33: #{forward.1} parent=11 // pred_check
        %p513 = pneg %p462
      $region34: #{forward.1} parent=11 // pred_check_branch
        %515 = sbr.rel (%p513) target = $region36
      $region35: #{forward.1} parent=11 // pred_region
        _
      $region36: #{forward.1} parent=11 // pred_fallthru
        _
    $region12: #{forward.1} parent=5 // pred_fallthru
      _
    %p516 = scmp.lt.s32.totalorder %s24, 2
    // Predicated region
    $region37: #{forward.1} parent=5 // pred_check
      %p517 = pneg %p516
    $region38: #{forward.1} parent=5 // pred_check_branch
      %519 = sbr.rel (%p517) target = $region40
    $region39: #{forward.1} parent=5 // pred_region
      // Predicated region
      $region41: #{forward.1} parent=39 // pred_check
        %p520 = pneg %p128
      $region42: #{forward.1} parent=39 // pred_check_branch
        %522 = sbr.rel (%p520) target = $region44
      $region43: #{forward.1} parent=39 // pred_region
        %p523 = scmp.lt.s32.totalorder %s24, 1
        %s524 = scalar_select %p523, %s24, 1
        %s525 = smul.addr %s524, 4
        %s526 = smul.addr %s525, 4
        %s527 = scalar_lea.vmem %s4, %s526
      $region44: #{forward.1} parent=39 // pred_fallthru
        _
      // Predicated region
      $region45: #{forward.1} parent=39 // pred_check
        %p528 = pneg %p154
      $region46: #{forward.1} parent=39 // pred_check_branch
        %530 = sbr.rel (%p528) target = $region48
      $region47: #{forward.1} parent=39 // pred_region
        %p531 = scmp.lt.s32.totalorder %s24, 1
        %s532 = scalar_select %p531, %s24, 1
        %s533 = scalar_lea.vmem %s5, %s532
      $region48: #{forward.1} parent=39 // pred_fallthru
        _
      // Predicated region
      $region49: #{forward.1} parent=39 // pred_check
        %p534 = pneg %p180
      $region50: #{forward.1} parent=39 // pred_check_branch
        %536 = sbr.rel (%p534) target = $region52
      $region51: #{forward.1} parent=39 // pred_region
        %p537 = scmp.lt.s32.totalorder %s24, 1
        %s538 = scalar_select %p537, %s24, 1
        %s539 = smul.addr %s538, 4
        %s540 = smul.addr %s539, 4
        %s541 = scalar_lea.vmem %s6, %s540
      $region52: #{forward.1} parent=39 // pred_fallthru
        _
      // Predicated region
      $region53: #{forward.1} parent=39 // pred_check
        %p542 = pneg %p206
      $region54: #{forward.1} parent=39 // pred_check_branch
        %544 = sbr.rel (%p542) target = $region56
      $region55: #{forward.1} parent=39 // pred_region
        %p545 = scmp.lt.s32.totalorder %s24, 1
        %s546 = scalar_select %p545, %s24, 1
        %s547 = scalar_lea.vmem %s7, %s546
      $region56: #{forward.1} parent=39 // pred_fallthru
        _
      // Predicated region
      $region57: #{forward.1} parent=39 // pred_check
        %p548 = pneg %p232
      $region58: #{forward.1} parent=39 // pred_check_branch
        %550 = sbr.rel (%p548) target = $region60
      $region59: #{forward.1} parent=39 // pred_region
        %p551 = scmp.lt.s32.totalorder %s24, 1
        %s552 = scalar_select %p551, %s24, 1
        %s553 = scalar_lea.vmem %s8, %s552
      $region60: #{forward.1} parent=39 // pred_fallthru
        _
      // Predicated region
      $region61: #{forward.1} parent=39 // pred_check
        %p554 = pneg %p258
      $region62: #{forward.1} parent=39 // pred_check_branch
        %556 = sbr.rel (%p554) target = $region64
      $region63: #{forward.1} parent=39 // pred_region
        %p557 = scmp.lt.s32.totalorder %s24, 1
        %s558 = scalar_select %p557, %s24, 1
        %s559 = scalar_lea.vmem %s9, %s558
      $region64: #{forward.1} parent=39 // pred_fallthru
        _
      // Predicated region
      $region65: #{forward.1} parent=39 // pred_check
        %p560 = pneg %p284
      $region66: #{forward.1} parent=39 // pred_check_branch
        %562 = sbr.rel (%p560) target = $region68
      $region67: #{forward.1} parent=39 // pred_region
        %p563 = scmp.lt.s32.totalorder %s24, 1
        %s564 = scalar_select %p563, %s24, 1
        %s565 = smul.addr %s564, 4
        %s566 = smul.addr %s565, 4
        %s567 = scalar_lea.vmem %s10, %s566
      $region68: #{forward.1} parent=39 // pred_fallthru
        _
      // Predicated region
      $region69: #{forward.1} parent=39 // pred_check
        %p568 = pneg %p310
      $region70: #{forward.1} parent=39 // pred_check_branch
        %570 = sbr.rel (%p568) target = $region72
      $region71: #{forward.1} parent=39 // pred_region
        %p571 = scmp.lt.s32.totalorder %s24, 1
        %s572 = scalar_select %p571, %s24, 1
        %s573 = scalar_lea.vmem %s11, %s572
      $region72: #{forward.1} parent=39 // pred_fallthru
        _
      // Predicated region
      $region73: #{forward.1} parent=39 // pred_check
        %p574 = pneg %p336
      $region74: #{forward.1} parent=39 // pred_check_branch
        %576 = sbr.rel (%p574) target = $region76
      $region75: #{forward.1} parent=39 // pred_region
        %p577 = scmp.lt.s32.totalorder %s24, 1
        %s578 = scalar_select %p577, %s24, 1
        %s579 = smul.addr %s578, 8
        %s580 = smul.addr %s579, 4
        %s581 = scalar_lea.vmem %s12, %s580
      $region76: #{forward.1} parent=39 // pred_fallthru
        _
      // Predicated region
      $region77: #{forward.1} parent=39 // pred_check
        %p582 = pneg %p362
      $region78: #{forward.1} parent=39 // pred_check_branch
        %584 = sbr.rel (%p582) target = $region80
      $region79: #{forward.1} parent=39 // pred_region
        %p585 = scmp.lt.s32.totalorder %s24, 1
        %s586 = scalar_select %p585, %s24, 1
        %s587 = scalar_lea.vmem %s13, %s586
      $region80: #{forward.1} parent=39 // pred_fallthru
        _
      // Predicated region
      $region81: #{forward.1} parent=39 // pred_check
        %p588 = pneg %p388
      $region82: #{forward.1} parent=39 // pred_check_branch
        %590 = sbr.rel (%p588) target = $region84
      $region83: #{forward.1} parent=39 // pred_region
        %p591 = scmp.lt.s32.totalorder %s24, 1
        %s592 = scalar_select %p591, %s24, 1
        %s593 = scalar_lea.vmem %s14, %s592
      $region84: #{forward.1} parent=39 // pred_fallthru
        _
      // Predicated region
      $region85: #{forward.1} parent=39 // pred_check
        %p594 = pneg %p414
      $region86: #{forward.1} parent=39 // pred_check_branch
        %596 = sbr.rel (%p594) target = $region88
      $region87: #{forward.1} parent=39 // pred_region
        %p597 = scmp.lt.s32.totalorder %s24, 1
        %s598 = scalar_select %p597, %s24, 1
        %s599 = scalar_lea.vmem %s15, %s598
      $region88: #{forward.1} parent=39 // pred_fallthru
        _
    $region40: #{forward.1} parent=5 // pred_fallthru
      _
    %p600 = scmp.le.s32.totalorder 1, %s24
    %p601 = scmp.lt.s32.totalorder %s24, 3
    %p602 = pnand %p600, %p601
    %p603 = pneg %p602
    // Predicated region
    $region89: #{forward.1} parent=5 // pred_check
      _
    $region90: #{forward.1} parent=5 // pred_check_branch
      %605 = sbr.rel (%p602) target = $region92
    $region91: #{forward.1} parent=5 // pred_region
      %s606 = ssub.s32 %s24, 1
      %p607 = pneg %p45
      %p608 = pneg %p42
      %p609 = pneg %p66
      %p610 = pneg %p63
      %p611 = pneg %p87
      %p612 = pneg %p84
      %p613 = pneg %p108
      %p614 = pneg %p105
      %p615 = scmp.lt.s32.totalorder %s29, 1
      %s616 = scalar_select %p615, %s29, 1
      %s617 = smul.addr %s616, 4
      %s618 = smul.addr %s617, 4
      %s619 = scalar_lea.vmem %s4, %s618
      %p620 = pneg %p134
      %p621 = pneg %p131
      %p622 = scmp.lt.s32.totalorder %s29, 1
      %s623 = scalar_select %p622, %s29, 1
      %s624 = scalar_lea.vmem %s5, %s623
      %p625 = pneg %p160
      %p626 = pneg %p157
      %p627 = scmp.lt.s32.totalorder %s29, 1
      %s628 = scalar_select %p627, %s29, 1
      %s629 = smul.addr %s628, 4
      %s630 = smul.addr %s629, 4
      %s631 = scalar_lea.vmem %s6, %s630
      %p632 = pneg %p186
      %p633 = pneg %p183
      %p634 = scmp.lt.s32.totalorder %s29, 1
      %s635 = scalar_select %p634, %s29, 1
      %s636 = scalar_lea.vmem %s7, %s635
      %p637 = pneg %p212
      %p638 = pneg %p209
      %p639 = scmp.lt.s32.totalorder %s29, 1
      %s640 = scalar_select %p639, %s29, 1
      %s641 = scalar_lea.vmem %s8, %s640
      %p642 = pneg %p238
      %p643 = pneg %p235
      %p644 = scmp.lt.s32.totalorder %s29, 1
      %s645 = scalar_select %p644, %s29, 1
      %s646 = scalar_lea.vmem %s9, %s645
      %p647 = pneg %p264
      %p648 = pneg %p261
      %p649 = scmp.lt.s32.totalorder %s29, 1
      %s650 = scalar_select %p649, %s29, 1
      %s651 = smul.addr %s650, 4
      %s652 = smul.addr %s651, 4
      %s653 = scalar_lea.vmem %s10, %s652
      %p654 = pneg %p290
      %p655 = pneg %p287
      %p656 = scmp.lt.s32.totalorder %s29, 1
      %s657 = scalar_select %p656, %s29, 1
      %s658 = scalar_lea.vmem %s11, %s657
      %p659 = pneg %p316
      %p660 = pneg %p313
      %p661 = scmp.lt.s32.totalorder %s29, 1
      %s662 = scalar_select %p661, %s29, 1
      %s663 = smul.addr %s662, 8
      %s664 = smul.addr %s663, 4
      %s665 = scalar_lea.vmem %s12, %s664
      %p666 = pneg %p342
      %p667 = pneg %p339
      %p668 = scmp.lt.s32.totalorder %s29, 1
      %s669 = scalar_select %p668, %s29, 1
      %s670 = scalar_lea.vmem %s13, %s669
      %p671 = pneg %p368
      %p672 = pneg %p365
      %p673 = scmp.lt.s32.totalorder %s29, 1
      %s674 = scalar_select %p673, %s29, 1
      %s675 = scalar_lea.vmem %s14, %s674
      %p676 = pneg %p394
      %p677 = pneg %p391
      %p678 = scmp.lt.s32.totalorder %s29, 1
      %s679 = scalar_select %p678, %s29, 1
      %s680 = scalar_lea.vmem %s15, %s679
      %p681 = pneg %p420
      %p682 = pneg %p417
      %p683 = pneg %p441
      %p684 = pneg %p438
      %p685 = pneg %p462
      %p686 = pneg %p459
      %p687 = pneg %p483
      %p688 = pneg %p480
      %p689 = scmp.lt.s32.totalorder %s29, 1
      %s690 = scalar_select %p689, %s29, 1
      %s691 = smul.addr %s690, 4
      %s692 = smul.addr %s691, 4
      %s693 = scalar_lea.vmem %s4, %s692
      %p694 = scmp.lt.s32.totalorder %s29, 1
      %s695 = scalar_select %p694, %s29, 1
      %s696 = scalar_lea.vmem %s5, %s695
      %p697 = scmp.lt.s32.totalorder %s29, 1
      %s698 = scalar_select %p697, %s29, 1
      %s699 = smul.addr %s698, 4
      %s700 = smul.addr %s699, 4
      %s701 = scalar_lea.vmem %s6, %s700
      %p702 = scmp.lt.s32.totalorder %s29, 1
      %s703 = scalar_select %p702, %s29, 1
      %s704 = scalar_lea.vmem %s7, %s703
      %p705 = scmp.lt.s32.totalorder %s29, 1
      %s706 = scalar_select %p705, %s29, 1
      %s707 = scalar_lea.vmem %s8, %s706
      %p708 = scmp.lt.s32.totalorder %s29, 1
      %s709 = scalar_select %p708, %s29, 1
      %s710 = scalar_lea.vmem %s9, %s709
      %p711 = scmp.lt.s32.totalorder %s29, 1
      %s712 = scalar_select %p711, %s29, 1
      %s713 = smul.addr %s712, 4
      %s714 = smul.addr %s713, 4
      %s715 = scalar_lea.vmem %s10, %s714
      %p716 = scmp.lt.s32.totalorder %s29, 1
      %s717 = scalar_select %p716, %s29, 1
      %s718 = scalar_lea.vmem %s11, %s717
      %p719 = scmp.lt.s32.totalorder %s29, 1
      %s720 = scalar_select %p719, %s29, 1
      %s721 = smul.addr %s720, 8
      %s722 = smul.addr %s721, 4
      %s723 = scalar_lea.vmem %s12, %s722
      %p724 = scmp.lt.s32.totalorder %s29, 1
      %s725 = scalar_select %p724, %s29, 1
      %s726 = scalar_lea.vmem %s13, %s725
      %p727 = scmp.lt.s32.totalorder %s29, 1
      %s728 = scalar_select %p727, %s29, 1
      %s729 = scalar_lea.vmem %s14, %s728
      %p730 = scmp.lt.s32.totalorder %s29, 1
      %s731 = scalar_select %p730, %s29, 1
      %s732 = scalar_lea.vmem %s15, %s731
      %p734 = scmp.eq.s32.totalorder %s29, 0
      // Predicated region
      $region93: #{forward.1} parent=91 // pred_check
        %p735 = pneg %p734
      $region94: #{forward.1} parent=91 // pred_check_branch
        %737 = sbr.rel (%p735) target = $region96
      $region95: #{forward.1} parent=91 // pred_region
        %v738 = vld [vmem:[%s0] sm:$0xff]
        %v739 = vld [vmem:[%s0 + $0x8] sm:$0xff]
        %v740 = vld [vmem:[%s2] sm:$0x1]
        %v741 = vld [vmem:[%s3] sm:$0x1]
        %vm742 = vcmask 261120
        %v743 = vsel %vm742, %v738, 0.0
        %744 = vadd.xlane.f32.xlu0 %v743
        %v745 = vpop.xlane.xlu0 %744
        %v746 = vsel %vm742, %v739, 0.0
        %747 = vadd.xlane.f32.xlu0 %v746
        %v748 = vpop.xlane.xlu0 %747
        %v749 = vrcp.pop 32.0
        %v750 = vmul.f32 32.0, %v749
        %v751 = vsub.f32 1.0, %v750
        %v752 = vmul.f32 %v749, %v751
        %v753 = vadd.f32 %v749, %v752
        %vm754 = vweird.f32 %v749
        %v755 = vsel %vm754, %v749, %v753
        %v756 = vmul.f32 %v745, %v755
        %v757 = vmul.f32 %v748, %v755
        %v758 = vsub.f32 %v738, %v756
        %v759 = vsub.f32 %v739, %v757
        %v760 = vmul.f32 %v758, %v758
        %v761 = vmul.f32 %v759, %v759
        %v762 = vsel %vm742, %v760, 0.0
        %763 = vadd.xlane.f32.xlu0 %v762
        %v764 = vpop.xlane.xlu0 %763
        %v765 = vsel %vm742, %v761, 0.0
        %766 = vadd.xlane.f32.xlu0 %v765
        %v767 = vpop.xlane.xlu0 %766
        %v768 = vmul.f32 %v764, %v755
        %v769 = vmul.f32 %v767, %v755
        %v770 = vadd.f32 %v768, 1e-12
        %v771 = vadd.f32 %v769, 1e-12
        %v772 = vrsqrt.pop %v770
        %v773 = vmul.f32 %v772, %v770
        %v774 = vmul.f32 %v773, %v772
        %v775 = vmul.f32 0.5, %v774
        %v776 = vsub.f32 1.5, %v775
        %v777 = vmul.f32 %v772, %v776
        %vm778 = vweird.f32 %v770
        %vm779 = vweird.f32 %v772
        %vm780 = vmor %vm778, %vm779
        %v781 = vsel %vm780, %v772, %v777
        %v782 = vrsqrt.pop %v771
        %v783 = vmul.f32 %v782, %v771
        %v784 = vmul.f32 %v783, %v782
        %v785 = vmul.f32 0.5, %v784
        %v786 = vsub.f32 1.5, %v785
        %v787 = vmul.f32 %v782, %v786
        %vm788 = vweird.f32 %v771
        %vm789 = vweird.f32 %v782
        %vm790 = vmor %vm788, %vm789
        %v791 = vsel %vm790, %v782, %v787
        %v792 = vmul.f32 %v758, %v781
        %v793 = vmul.f32 %v759, %v791
        %v795 = vperm.slane %v740, 0
        %v797 = vmul.f32 %v792, %v795
        %v798 = vmul.f32 %v793, %v795
        %v800 = vperm.slane %v741, 0
        %v802 = vadd.f32 %v797, %v800
        %v803 = vadd.f32 %v798, %v800
        %804 = vst.msk [vmem:[#allocation2] sm:$0xff] %vm742, %v802
        %805 = vst.msk [vmem:[#allocation2 + $0x8] sm:$0xff] %vm742, %v803
      $region96: #{forward.1} parent=91 // pred_fallthru
        _
      %v806 = vld [vmem:[#allocation2] sm:$0xff]
      %v807 = vld [vmem:[#allocation2 + $0x8] sm:$0xff]
      %v808 = vld [vmem:[%s1] sm:$0x3]
      %v809 = vsub.f32 1.0, %v808
      %v810 = vmul.f32 %v809, -10000.0
      %v812 = vrot.slane %v810, 1
      %v813 = vpack.c.bf16 %v807, %v806
      %v814 = vld [vmem:[%s693] sm:$0xf]
      %v815 = vld [vmem:[%s693 + $0x4] sm:$0xf]
      %v816 = vld [vmem:[%s693 + $0x8] sm:$0xf]
      %v817 = vld [vmem:[%s693 + $0xc] sm:$0xf]
      %v818 = vld [vmem:[%s696] sm:$0x1]
      %v820 = vperm.slane %v818, 0
      %v826 = vunpack.c.l.b16 %v814
      %v827 = vunpack.c.l.b16 %v815
      %v828 = vunpack.c.l.b16 %v816
      %v829 = vunpack.c.l.b16 %v817
      %v830 = vpack.c.b16 %v827, %v826
      %v831 = vpack.c.b16 %v829, %v828
      %vm834 = vcmask 261120
      %v836 = vsel %vm834, %v813, 0
      %838 = vmatpush.bf16.msra.mxu0 0
      %839 = vmatpush.bf16.msra.mxu0 0
      %840 = vmatpush.bf16.msra.mxu0 0
      %841 = vmatpush.bf16.msra.mxu0 0
      %842 = vmatpush.bf16.msra.mxu0 0
      %843 = vmatpush.bf16.msra.mxu0 0
      %844 = vmatpush.bf16.msra.mxu0 %v831
      %845 = vmatpush.bf16.msra.mxu0 %v830
      %846 = vmatmul.bf16.gmra.mxu0 %v836
      %v847 = vpop.f32.mrf.mxu0
      %v848 = vadd.f32 %v820, %v847
      %v849 = vpop.f32.mrf.mxu0
      %v850 = vadd.f32 %v820, %v849
      %851 = vdwg.mxu0
      %854 = vrot.lane.b32.xlu0 %v848, 112
      %v855 = vpop.permute.xlu0 %854
      %856 = vrot.lane.b32.xlu0 %v850, 112
      %v857 = vpop.permute.xlu0 %856
      %v860 = vrot.slane %v848, 4
      %vm861 = vcmask 1047556
      %v862 = vsel %vm861, 0.0, %v860
      %v864 = vunpack.c.l.s4 1983009808
      %v865 = vunpack.c.0.s8 %v864
      %v866 = vperm.slane %v848, %v865
      %v868 = vunpack.c.l.s4 1983009808
      %v869 = vunpack.c.0.s8 %v868
      %v870 = vperm.slane %v862, %v869
      %v871 = vrot.slane %v855, 4
      %v872 = vsel %vm861, 0.0, %v871
      %v874 = vunpack.c.l.s4 1983009808
      %v875 = vunpack.c.0.s8 %v874
      %v876 = vperm.slane %v855, %v875
      %v878 = vunpack.c.l.s4 1983009808
      %v879 = vunpack.c.0.s8 %v878
      %v880 = vperm.slane %v872, %v879
      %v881 = vrot.slane %v876, 4
      %v882 = vsel %vm861, %v881, %v866
      %v883 = vrot.slane %v866, 4
      %v884 = vsel %vm861, %v876, %v883
      %v886 = vunpack.c.l.s4 1934713408
      %v887 = vunpack.c.0.s8 %v886
      %v888 = vperm.slane %v882, %v887
      %v890 = vunpack.c.l.s4 1934713408
      %v891 = vunpack.c.0.s8 %v890
      %v892 = vperm.slane %v884, %v891
      %v893 = vrot.slane %v880, 4
      %v894 = vsel %vm861, %v893, %v870
      %v895 = vrot.slane %v870, 4
      %v896 = vsel %vm861, %v880, %v895
      %v898 = vunpack.c.l.s4 1934713408
      %v899 = vunpack.c.0.s8 %v898
      %v900 = vperm.slane %v894, %v899
      %v902 = vunpack.c.l.s4 1934713408
      %v903 = vunpack.c.0.s8 %v902
      %v904 = vperm.slane %v896, %v903
      %v905 = vrot.slane %v888, 4
      %v906 = vsel %vm861, 0.0, %v905
      %v907 = vrot.slane %v892, 4
      %v908 = vsel %vm861, 0.0, %v907
      %v909 = vrot.slane %v900, 4
      %v910 = vsel %vm861, 0.0, %v909
      %v911 = vrot.slane %v904, 4
      %v912 = vsel %vm861, 0.0, %v911
      %v913 = vrot.slane %v850, 4
      %v914 = vsel %vm861, 0.0, %v913
      %v916 = vunpack.c.l.s4 1983009808
      %v917 = vunpack.c.0.s8 %v916
      %v918 = vperm.slane %v850, %v917
      %v920 = vunpack.c.l.s4 1983009808
      %v921 = vunpack.c.0.s8 %v920
      %v922 = vperm.slane %v914, %v921
      %v923 = vrot.slane %v857, 4
      %v924 = vsel %vm861, 0.0, %v923
      %v926 = vunpack.c.l.s4 1983009808
      %v927 = vunpack.c.0.s8 %v926
      %v928 = vperm.slane %v857, %v927
      %v930 = vunpack.c.l.s4 1983009808
      %v931 = vunpack.c.0.s8 %v930
      %v932 = vperm.slane %v924, %v931
      %v933 = vrot.slane %v928, 4
      %v934 = vsel %vm861, %v933, %v918
      %v935 = vrot.slane %v918, 4
      %v936 = vsel %vm861, %v928, %v935
      %v938 = vunpack.c.l.s4 1934713408
      %v939 = vunpack.c.0.s8 %v938
      %v940 = vperm.slane %v934, %v939
      %v942 = vunpack.c.l.s4 1934713408
      %v943 = vunpack.c.0.s8 %v942
      %v944 = vperm.slane %v936, %v943
      %v945 = vrot.slane %v932, 4
      %v946 = vsel %vm861, %v945, %v922
      %v947 = vrot.slane %v922, 4
      %v948 = vsel %vm861, %v932, %v947
      %v950 = vunpack.c.l.s4 1934713408
      %v951 = vunpack.c.0.s8 %v950
      %v952 = vperm.slane %v946, %v951
      %v954 = vunpack.c.l.s4 1934713408
      %v955 = vunpack.c.0.s8 %v954
      %v956 = vperm.slane %v948, %v955
      %v957 = vrot.slane %v940, 4
      %v958 = vsel %vm861, 0.0, %v957
      %v959 = vrot.slane %v944, 4
      %v960 = vsel %vm861, 0.0, %v959
      %v961 = vrot.slane %v952, 4
      %v962 = vsel %vm861, 0.0, %v961
      %v963 = vrot.slane %v956, 4
      %v964 = vsel %vm861, 0.0, %v963
      %v965 = vsel %vm861, %v907, %v888
      %v967 = vunpack.c.l.s4 1983009808
      %v968 = vunpack.c.0.s8 %v967
      %v969 = vperm.slane %v965, %v968
      %v970 = vrot.slane %v908, 4
      %v971 = vsel %vm861, %v970, %v906
      %v973 = vunpack.c.l.s4 1983009808
      %v974 = vunpack.c.0.s8 %v973
      %v975 = vperm.slane %v971, %v974
      %v976 = vsel %vm861, %v911, %v900
      %v978 = vunpack.c.l.s4 1983009808
      %v979 = vunpack.c.0.s8 %v978
      %v980 = vperm.slane %v976, %v979
      %v981 = vrot.slane %v912, 4
      %v982 = vsel %vm861, %v981, %v910
      %v984 = vunpack.c.l.s4 1983009808
      %v985 = vunpack.c.0.s8 %v984
      %v986 = vperm.slane %v982, %v985
      %v987 = vrot.slane %v975, 4
      %v988 = vsel %vm861, %v987, %v969
      %v990 = vunpack.c.l.s4 1934713408
      %v991 = vunpack.c.0.s8 %v990
      %v992 = vperm.slane %v988, %v991
      %v993 = vrot.slane %v986, 4
      %v994 = vsel %vm861, %v993, %v980
      %v996 = vunpack.c.l.s4 1934713408
      %v997 = vunpack.c.0.s8 %v996
      %v998 = vperm.slane %v994, %v997
      %v999 = vrot.slane %v998, 4
      %v1000 = vsel %vm861, %v999, %v992
      %v1001 = vrot.slane %v992, 4
      %v1002 = vsel %vm861, %v998, %v1001
      %v1003 = vsel %vm861, %v959, %v940
      %v1005 = vunpack.c.l.s4 1983009808
      %v1006 = vunpack.c.0.s8 %v1005
      %v1007 = vperm.slane %v1003, %v1006
      %v1008 = vrot.slane %v960, 4
      %v1009 = vsel %vm861, %v1008, %v958
      %v1011 = vunpack.c.l.s4 1983009808
      %v1012 = vunpack.c.0.s8 %v1011
      %v1013 = vperm.slane %v1009, %v1012
      %v1014 = vsel %vm861, %v963, %v952
      %v1016 = vunpack.c.l.s4 1983009808
      %v1017 = vunpack.c.0.s8 %v1016
      %v1018 = vperm.slane %v1014, %v1017
      %v1019 = vrot.slane %v964, 4
      %v1020 = vsel %vm861, %v1019, %v962
      %v1022 = vunpack.c.l.s4 1983009808
      %v1023 = vunpack.c.0.s8 %v1022
      %v1024 = vperm.slane %v1020, %v1023
      %v1025 = vrot.slane %v1013, 4
      %v1026 = vsel %vm861, %v1025, %v1007
      %v1028 = vunpack.c.l.s4 1934713408
      %v1029 = vunpack.c.0.s8 %v1028
      %v1030 = vperm.slane %v1026, %v1029
      %v1031 = vrot.slane %v1024, 4
      %v1032 = vsel %vm861, %v1031, %v1018
      %v1034 = vunpack.c.l.s4 1934713408
      %v1035 = vunpack.c.0.s8 %v1034
      %v1036 = vperm.slane %v1032, %v1035
      %v1037 = vrot.slane %v1036, 4
      %v1038 = vsel %vm861, %v1037, %v1030
      %v1039 = vrot.slane %v1030, 4
      %v1040 = vsel %vm861, %v1036, %v1039
      %1041 = vrot.lane.b32.xlu0 %v848, 96
      %v1042 = vpop.permute.xlu0 %1041
      %1043 = vrot.lane.b32.xlu0 %v850, 96
      %v1044 = vpop.permute.xlu0 %1043
      %1045 = vrot.lane.b32.xlu0 %v855, 96
      %v1046 = vpop.permute.xlu0 %1045
      %1047 = vrot.lane.b32.xlu0 %v857, 96
      %v1048 = vpop.permute.xlu0 %1047
      %v1053 = vrot.slane %v1042, 4
      %v1054 = vsel %vm861, 0.0, %v1053
      %v1056 = vunpack.c.l.s4 1983009808
      %v1057 = vunpack.c.0.s8 %v1056
      %v1058 = vperm.slane %v1042, %v1057
      %v1060 = vunpack.c.l.s4 1983009808
      %v1061 = vunpack.c.0.s8 %v1060
      %v1062 = vperm.slane %v1054, %v1061
      %v1063 = vrot.slane %v1046, 4
      %v1064 = vsel %vm861, 0.0, %v1063
      %v1066 = vunpack.c.l.s4 1983009808
      %v1067 = vunpack.c.0.s8 %v1066
      %v1068 = vperm.slane %v1046, %v1067
      %v1070 = vunpack.c.l.s4 1983009808
      %v1071 = vunpack.c.0.s8 %v1070
      %v1072 = vperm.slane %v1064, %v1071
      %v1073 = vrot.slane %v1068, 4
      %v1074 = vsel %vm861, %v1073, %v1058
      %v1075 = vrot.slane %v1058, 4
      %v1076 = vsel %vm861, %v1068, %v1075
      %v1078 = vunpack.c.l.s4 1934713408
      %v1079 = vunpack.c.0.s8 %v1078
      %v1080 = vperm.slane %v1074, %v1079
      %v1082 = vunpack.c.l.s4 1934713408
      %v1083 = vunpack.c.0.s8 %v1082
      %v1084 = vperm.slane %v1076, %v1083
      %v1085 = vrot.slane %v1072, 4
      %v1086 = vsel %vm861, %v1085, %v1062
      %v1087 = vrot.slane %v1062, 4
      %v1088 = vsel %vm861, %v1072, %v1087
      %v1090 = vunpack.c.l.s4 1934713408
      %v1091 = vunpack.c.0.s8 %v1090
      %v1092 = vperm.slane %v1086, %v1091
      %v1094 = vunpack.c.l.s4 1934713408
      %v1095 = vunpack.c.0.s8 %v1094
      %v1096 = vperm.slane %v1088, %v1095
      %v1097 = vrot.slane %v1080, 4
      %v1098 = vsel %vm861, 0.0, %v1097
      %v1099 = vrot.slane %v1084, 4
      %v1100 = vsel %vm861, 0.0, %v1099
      %v1101 = vrot.slane %v1092, 4
      %v1102 = vsel %vm861, 0.0, %v1101
      %v1103 = vrot.slane %v1096, 4
      %v1104 = vsel %vm861, 0.0, %v1103
      %v1105 = vrot.slane %v1044, 4
      %v1106 = vsel %vm861, 0.0, %v1105
      %v1108 = vunpack.c.l.s4 1983009808
      %v1109 = vunpack.c.0.s8 %v1108
      %v1110 = vperm.slane %v1044, %v1109
      %v1112 = vunpack.c.l.s4 1983009808
      %v1113 = vunpack.c.0.s8 %v1112
      %v1114 = vperm.slane %v1106, %v1113
      %v1115 = vrot.slane %v1048, 4
      %v1116 = vsel %vm861, 0.0, %v1115
      %v1118 = vunpack.c.l.s4 1983009808
      %v1119 = vunpack.c.0.s8 %v1118
      %v1120 = vperm.slane %v1048, %v1119
      %v1122 = vunpack.c.l.s4 1983009808
      %v1123 = vunpack.c.0.s8 %v1122
      %v1124 = vperm.slane %v1116, %v1123
      %v1125 = vrot.slane %v1120, 4
      %v1126 = vsel %vm861, %v1125, %v1110
      %v1127 = vrot.slane %v1110, 4
      %v1128 = vsel %vm861, %v1120, %v1127
      %v1130 = vunpack.c.l.s4 1934713408
      %v1131 = vunpack.c.0.s8 %v1130
      %v1132 = vperm.slane %v1126, %v1131
      %v1134 = vunpack.c.l.s4 1934713408
      %v1135 = vunpack.c.0.s8 %v1134
      %v1136 = vperm.slane %v1128, %v1135
      %v1137 = vrot.slane %v1124, 4
      %v1138 = vsel %vm861, %v1137, %v1114
      %v1139 = vrot.slane %v1114, 4
      %v1140 = vsel %vm861, %v1124, %v1139
      %v1142 = vunpack.c.l.s4 1934713408
      %v1143 = vunpack.c.0.s8 %v1142
      %v1144 = vperm.slane %v1138, %v1143
      %v1146 = vunpack.c.l.s4 1934713408
      %v1147 = vunpack.c.0.s8 %v1146
      %v1148 = vperm.slane %v1140, %v1147
      %v1149 = vrot.slane %v1132, 4
      %v1150 = vsel %vm861, 0.0, %v1149
      %v1151 = vrot.slane %v1136, 4
      %v1152 = vsel %vm861, 0.0, %v1151
      %v1153 = vrot.slane %v1144, 4
      %v1154 = vsel %vm861, 0.0, %v1153
      %v1155 = vrot.slane %v1148, 4
      %v1156 = vsel %vm861, 0.0, %v1155
      %v1157 = vsel %vm861, %v1099, %v1080
      %v1159 = vunpack.c.l.s4 1983009808
      %v1160 = vunpack.c.0.s8 %v1159
      %v1161 = vperm.slane %v1157, %v1160
      %v1162 = vrot.slane %v1100, 4
      %v1163 = vsel %vm861, %v1162, %v1098
      %v1165 = vunpack.c.l.s4 1983009808
      %v1166 = vunpack.c.0.s8 %v1165
      %v1167 = vperm.slane %v1163, %v1166
      %v1168 = vsel %vm861, %v1103, %v1092
      %v1170 = vunpack.c.l.s4 1983009808
      %v1171 = vunpack.c.0.s8 %v1170
      %v1172 = vperm.slane %v1168, %v1171
      %v1173 = vrot.slane %v1104, 4
      %v1174 = vsel %vm861, %v1173, %v1102
      %v1176 = vunpack.c.l.s4 1983009808
      %v1177 = vunpack.c.0.s8 %v1176
      %v1178 = vperm.slane %v1174, %v1177
      %v1179 = vrot.slane %v1167, 4
      %v1180 = vsel %vm861, %v1179, %v1161
      %v1182 = vunpack.c.l.s4 1934713408
      %v1183 = vunpack.c.0.s8 %v1182
      %v1184 = vperm.slane %v1180, %v1183
      %v1185 = vrot.slane %v1178, 4
      %v1186 = vsel %vm861, %v1185, %v1172
      %v1188 = vunpack.c.l.s4 1934713408
      %v1189 = vunpack.c.0.s8 %v1188
      %v1190 = vperm.slane %v1186, %v1189
      %v1191 = vrot.slane %v1190, 4
      %v1192 = vsel %vm861, %v1191, %v1184
      %v1193 = vrot.slane %v1184, 4
      %v1194 = vsel %vm861, %v1190, %v1193
      %v1195 = vsel %vm861, %v1151, %v1132
      %v1197 = vunpack.c.l.s4 1983009808
      %v1198 = vunpack.c.0.s8 %v1197
      %v1199 = vperm.slane %v1195, %v1198
      %v1200 = vrot.slane %v1152, 4
      %v1201 = vsel %vm861, %v1200, %v1150
      %v1203 = vunpack.c.l.s4 1983009808
      %v1204 = vunpack.c.0.s8 %v1203
      %v1205 = vperm.slane %v1201, %v1204
      %v1206 = vsel %vm861, %v1155, %v1144
      %v1208 = vunpack.c.l.s4 1983009808
      %v1209 = vunpack.c.0.s8 %v1208
      %v1210 = vperm.slane %v1206, %v1209
      %v1211 = vrot.slane %v1156, 4
      %v1212 = vsel %vm861, %v1211, %v1154
      %v1214 = vunpack.c.l.s4 1983009808
      %v1215 = vunpack.c.0.s8 %v1214
      %v1216 = vperm.slane %v1212, %v1215
      %v1217 = vrot.slane %v1205, 4
      %v1218 = vsel %vm861, %v1217, %v1199
      %v1220 = vunpack.c.l.s4 1934713408
      %v1221 = vunpack.c.0.s8 %v1220
      %v1222 = vperm.slane %v1218, %v1221
      %v1223 = vrot.slane %v1216, 4
      %v1224 = vsel %vm861, %v1223, %v1210
      %v1226 = vunpack.c.l.s4 1934713408
      %v1227 = vunpack.c.0.s8 %v1226
      %v1228 = vperm.slane %v1224, %v1227
      %v1229 = vrot.slane %v1228, 4
      %v1230 = vsel %vm861, %v1229, %v1222
      %v1231 = vrot.slane %v1222, 4
      %v1232 = vsel %vm861, %v1228, %v1231
      %1233 = vrot.lane.b32.xlu0 %v848, 64
      %v1234 = vpop.permute.xlu0 %1233
      %1235 = vrot.lane.b32.xlu0 %v850, 64
      %v1236 = vpop.permute.xlu0 %1235
      %1237 = vrot.lane.b32.xlu0 %v855, 64
      %v1238 = vpop.permute.xlu0 %1237
      %1239 = vrot.lane.b32.xlu0 %v857, 64
      %v1240 = vpop.permute.xlu0 %1239
      %v1245 = vrot.slane %v1234, 4
      %v1246 = vsel %vm861, 0.0, %v1245
      %v1248 = vunpack.c.l.s4 1983009808
      %v1249 = vunpack.c.0.s8 %v1248
      %v1250 = vperm.slane %v1234, %v1249
      %v1252 = vunpack.c.l.s4 1983009808
      %v1253 = vunpack.c.0.s8 %v1252
      %v1254 = vperm.slane %v1246, %v1253
      %v1255 = vrot.slane %v1238, 4
      %v1256 = vsel %vm861, 0.0, %v1255
      %v1258 = vunpack.c.l.s4 1983009808
      %v1259 = vunpack.c.0.s8 %v1258
      %v1260 = vperm.slane %v1238, %v1259
      %v1262 = vunpack.c.l.s4 1983009808
      %v1263 = vunpack.c.0.s8 %v1262
      %v1264 = vperm.slane %v1256, %v1263
      %v1265 = vrot.slane %v1260, 4
      %v1266 = vsel %vm861, %v1265, %v1250
      %v1267 = vrot.slane %v1250, 4
      %v1268 = vsel %vm861, %v1260, %v1267
      %v1270 = vunpack.c.l.s4 1934713408
      %v1271 = vunpack.c.0.s8 %v1270
      %v1272 = vperm.slane %v1266, %v1271
      %v1274 = vunpack.c.l.s4 1934713408
      %v1275 = vunpack.c.0.s8 %v1274
      %v1276 = vperm.slane %v1268, %v1275
      %v1277 = vrot.slane %v1264, 4
      %v1278 = vsel %vm861, %v1277, %v1254
      %v1279 = vrot.slane %v1254, 4
      %v1280 = vsel %vm861, %v1264, %v1279
      %v1282 = vunpack.c.l.s4 1934713408
      %v1283 = vunpack.c.0.s8 %v1282
      %v1284 = vperm.slane %v1278, %v1283
      %v1286 = vunpack.c.l.s4 1934713408
      %v1287 = vunpack.c.0.s8 %v1286
      %v1288 = vperm.slane %v1280, %v1287
      %v1289 = vrot.slane %v1272, 4
      %v1290 = vsel %vm861, 0.0, %v1289
      %v1291 = vrot.slane %v1276, 4
      %v1292 = vsel %vm861, 0.0, %v1291
      %v1293 = vrot.slane %v1284, 4
      %v1294 = vsel %vm861, 0.0, %v1293
      %v1295 = vrot.slane %v1288, 4
      %v1296 = vsel %vm861, 0.0, %v1295
      %v1297 = vrot.slane %v1236, 4
      %v1298 = vsel %vm861, 0.0, %v1297
      %v1300 = vunpack.c.l.s4 1983009808
      %v1301 = vunpack.c.0.s8 %v1300
      %v1302 = vperm.slane %v1236, %v1301
      %v1304 = vunpack.c.l.s4 1983009808
      %v1305 = vunpack.c.0.s8 %v1304
      %v1306 = vperm.slane %v1298, %v1305
      %v1307 = vrot.slane %v1240, 4
      %v1308 = vsel %vm861, 0.0, %v1307
      %v1310 = vunpack.c.l.s4 1983009808
      %v1311 = vunpack.c.0.s8 %v1310
      %v1312 = vperm.slane %v1240, %v1311
      %v1314 = vunpack.c.l.s4 1983009808
      %v1315 = vunpack.c.0.s8 %v1314
      %v1316 = vperm.slane %v1308, %v1315
      %v1317 = vrot.slane %v1312, 4
      %v1318 = vsel %vm861, %v1317, %v1302
      %v1319 = vrot.slane %v1302, 4
      %v1320 = vsel %vm861, %v1312, %v1319
      %v1322 = vunpack.c.l.s4 1934713408
      %v1323 = vunpack.c.0.s8 %v1322
      %v1324 = vperm.slane %v1318, %v1323
      %v1326 = vunpack.c.l.s4 1934713408
      %v1327 = vunpack.c.0.s8 %v1326
      %v1328 = vperm.slane %v1320, %v1327
      %v1329 = vrot.slane %v1316, 4
      %v1330 = vsel %vm861, %v1329, %v1306
      %v1331 = vrot.slane %v1306, 4
      %v1332 = vsel %vm861, %v1316, %v1331
      %v1334 = vunpack.c.l.s4 1934713408
      %v1335 = vunpack.c.0.s8 %v1334
      %v1336 = vperm.slane %v1330, %v1335
      %v1338 = vunpack.c.l.s4 1934713408
      %v1339 = vunpack.c.0.s8 %v1338
      %v1340 = vperm.slane %v1332, %v1339
      %v1341 = vrot.slane %v1324, 4
      %v1342 = vsel %vm861, 0.0, %v1341
      %v1343 = vrot.slane %v1328, 4
      %v1344 = vsel %vm861, 0.0, %v1343
      %v1345 = vrot.slane %v1336, 4
      %v1346 = vsel %vm861, 0.0, %v1345
      %v1347 = vrot.slane %v1340, 4
      %v1348 = vsel %vm861, 0.0, %v1347
      %v1349 = vsel %vm861, %v1291, %v1272
      %v1351 = vunpack.c.l.s4 1983009808
      %v1352 = vunpack.c.0.s8 %v1351
      %v1353 = vperm.slane %v1349, %v1352
      %v1354 = vrot.slane %v1292, 4
      %v1355 = vsel %vm861, %v1354, %v1290
      %v1357 = vunpack.c.l.s4 1983009808
      %v1358 = vunpack.c.0.s8 %v1357
      %v1359 = vperm.slane %v1355, %v1358
      %v1360 = vsel %vm861, %v1295, %v1284
      %v1362 = vunpack.c.l.s4 1983009808
      %v1363 = vunpack.c.0.s8 %v1362
      %v1364 = vperm.slane %v1360, %v1363
      %v1365 = vrot.slane %v1296, 4
      %v1366 = vsel %vm861, %v1365, %v1294
      %v1368 = vunpack.c.l.s4 1983009808
      %v1369 = vunpack.c.0.s8 %v1368
      %v1370 = vperm.slane %v1366, %v1369
      %v1371 = vrot.slane %v1359, 4
      %v1372 = vsel %vm861, %v1371, %v1353
      %v1374 = vunpack.c.l.s4 1934713408
      %v1375 = vunpack.c.0.s8 %v1374
      %v1376 = vperm.slane %v1372, %v1375
      %v1377 = vrot.slane %v1370, 4
      %v1378 = vsel %vm861, %v1377, %v1364
      %v1380 = vunpack.c.l.s4 1934713408
      %v1381 = vunpack.c.0.s8 %v1380
      %v1382 = vperm.slane %v1378, %v1381
      %v1383 = vrot.slane %v1382, 4
      %v1384 = vsel %vm861, %v1383, %v1376
      %v1385 = vrot.slane %v1376, 4
      %v1386 = vsel %vm861, %v1382, %v1385
      %v1387 = vsel %vm861, %v1343, %v1324
      %v1389 = vunpack.c.l.s4 1983009808
      %v1390 = vunpack.c.0.s8 %v1389
      %v1391 = vperm.slane %v1387, %v1390
      %v1392 = vrot.slane %v1344, 4
      %v1393 = vsel %vm861, %v1392, %v1342
      %v1395 = vunpack.c.l.s4 1983009808
      %v1396 = vunpack.c.0.s8 %v1395
      %v1397 = vperm.slane %v1393, %v1396
      %v1398 = vsel %vm861, %v1347, %v1336
      %v1400 = vunpack.c.l.s4 1983009808
      %v1401 = vunpack.c.0.s8 %v1400
      %v1402 = vperm.slane %v1398, %v1401
      %v1403 = vrot.slane %v1348, 4
      %v1404 = vsel %vm861, %v1403, %v1346
      %v1406 = vunpack.c.l.s4 1983009808
      %v1407 = vunpack.c.0.s8 %v1406
      %v1408 = vperm.slane %v1404, %v1407
      %v1409 = vrot.slane %v1397, 4
      %v1410 = vsel %vm861, %v1409, %v1391
      %v1412 = vunpack.c.l.s4 1934713408
      %v1413 = vunpack.c.0.s8 %v1412
      %v1414 = vperm.slane %v1410, %v1413
      %v1415 = vrot.slane %v1408, 4
      %v1416 = vsel %vm861, %v1415, %v1402
      %v1418 = vunpack.c.l.s4 1934713408
      %v1419 = vunpack.c.0.s8 %v1418
      %v1420 = vperm.slane %v1416, %v1419
      %v1421 = vrot.slane %v1420, 4
      %v1422 = vsel %vm861, %v1421, %v1414
      %v1423 = vrot.slane %v1414, 4
      %v1424 = vsel %vm861, %v1420, %v1423
      %v1425 = vpack.c.bf16 %v1000, %v1000
      %v1426 = vpack.c.bf16 %v1002, %v1002
      %v1427 = vpack.c.bf16 %v1038, %v1038
      %v1428 = vpack.c.bf16 %v1040, %v1040
      %v1429 = vpack.c.bf16 %v1192, %v1192
      %v1430 = vpack.c.bf16 %v1194, %v1194
      %v1431 = vpack.c.bf16 %v1230, %v1230
      %v1432 = vpack.c.bf16 %v1232, %v1232
      %v1433 = vperm.slane %v810, 0
      %v1434 = vperm.slane %v812, 0
      %vm1437 = vcmask 130048
      %v1439 = vsel %vm1437, %v1425, 0
      %v1442 = vsel %vm1437, %v1429, 0
      %1444 = vmatpush.bf16.xpose.msra.mxu0 0
      %1445 = vmatpush.bf16.xpose.msra.mxu0 0
      %1446 = vmatpush.bf16.xpose.msra.mxu0 0
      %1447 = vmatpush.bf16.xpose.msra.mxu0 0
      %1448 = vmatpush.bf16.xpose.msra.mxu0 0
      %1449 = vmatpush.bf16.xpose.msra.mxu0 0
      %1450 = vmatpush.bf16.xpose.msra.mxu0 0
      %1451 = vmatpush.bf16.xpose.msra.mxu0 %v1442
      %1452 = vmatmul.bf16.gmra.mxu0 %v1439
      %v1453 = vpop.f32.mrf.mxu0
      %v1454 = vadd.f32 %v1433, %v1453
      %v1455 = vpop.f32.mrf.mxu0
      %1456 = vdwg.mxu0
      %v1458 = vsel %vm1437, %v1426, 0
      %v1461 = vsel %vm1437, %v1430, 0
      %1463 = vmatpush.bf16.xpose.msra.mxu0 0
      %1464 = vmatpush.bf16.xpose.msra.mxu0 0
      %1465 = vmatpush.bf16.xpose.msra.mxu0 0
      %1466 = vmatpush.bf16.xpose.msra.mxu0 0
      %1467 = vmatpush.bf16.xpose.msra.mxu0 0
      %1468 = vmatpush.bf16.xpose.msra.mxu0 0
      %1469 = vmatpush.bf16.xpose.msra.mxu0 0
      %1470 = vmatpush.bf16.xpose.msra.mxu0 %v1461
      %1471 = vmatmul.bf16.gmra.mxu0 %v1458
      %v1472 = vpop.f32.mrf.mxu0
      %v1473 = vadd.f32 %v1433, %v1472
      %v1474 = vpop.f32.mrf.mxu0
      %1475 = vdwg.mxu0
      %v1477 = vsel %vm1437, %v1427, 0
      %v1480 = vsel %vm1437, %v1431, 0
      %1482 = vmatpush.bf16.xpose.msra.mxu0 0
      %1483 = vmatpush.bf16.xpose.msra.mxu0 0
      %1484 = vmatpush.bf16.xpose.msra.mxu0 0
      %1485 = vmatpush.bf16.xpose.msra.mxu0 0
      %1486 = vmatpush.bf16.xpose.msra.mxu0 0
      %1487 = vmatpush.bf16.xpose.msra.mxu0 0
      %1488 = vmatpush.bf16.xpose.msra.mxu0 0
      %1489 = vmatpush.bf16.xpose.msra.mxu0 %v1480
      %1490 = vmatmul.bf16.gmra.mxu0 %v1477
      %v1491 = vpop.f32.mrf.mxu0
      %v1492 = vadd.f32 %v1434, %v1491
      %v1493 = vpop.f32.mrf.mxu0
      %1494 = vdwg.mxu0
      %v1496 = vsel %vm1437, %v1428, 0
      %v1499 = vsel %vm1437, %v1432, 0
      %1501 = vmatpush.bf16.xpose.msra.mxu0 0
      %1502 = vmatpush.bf16.xpose.msra.mxu0 0
      %1503 = vmatpush.bf16.xpose.msra.mxu0 0
      %1504 = vmatpush.bf16.xpose.msra.mxu0 0
      %1505 = vmatpush.bf16.xpose.msra.mxu0 0
      %1506 = vmatpush.bf16.xpose.msra.mxu0 0
      %1507 = vmatpush.bf16.xpose.msra.mxu0 0
      %1508 = vmatpush.bf16.xpose.msra.mxu0 %v1499
      %1509 = vmatmul.bf16.gmra.mxu0 %v1496
      %v1510 = vpop.f32.mrf.mxu0
      %v1511 = vadd.f32 %v1434, %v1510
      %v1512 = vpop.f32.mrf.mxu0
      %1513 = vdwg.mxu0
      %vm1514 = vcmask 64512
      %v1515 = vsel %vm1514, %v1454, -inf
      %1516 = vmax.xlane.f32.xlu0 %v1515
      %v1517 = vpop.xlane.xlu0 %1516
      %v1518 = vsel %vm1514, %v1473, -inf
      %1519 = vmax.xlane.f32.xlu0 %v1518
      %v1520 = vpop.xlane.xlu0 %1519
      %v1521 = vsel %vm1514, %v1492, -inf
      %1522 = vmax.xlane.f32.xlu0 %v1521
      %v1523 = vpop.xlane.xlu0 %1522
      %v1524 = vsel %vm1514, %v1511, -inf
      %1525 = vmax.xlane.f32.xlu0 %v1524
      %v1526 = vpop.xlane.xlu0 %1525
      %v1527 = vsub.f32 %v1454, %v1517
      %v1528 = vsub.f32 %v1473, %v1520
      %v1529 = vsub.f32 %v1492, %v1523
      %v1530 = vsub.f32 %v1511, %v1526
      %v1531 = vmul.f32 %v1527, 1.442695
      %v1532 = vpow.pop %v1531
      %v1533 = vmul.f32 %v1528, 1.442695
      %v1534 = vpow.pop %v1533
      %v1535 = vmul.f32 %v1529, 1.442695
      %v1536 = vpow.pop %v1535
      %v1537 = vmul.f32 %v1530, 1.442695
      %v1538 = vpow.pop %v1537
      %v1539 = vsel %vm1514, %v1532, 0.0
      %1540 = vadd.xlane.f32.xlu0 %v1539
      %v1541 = vpop.xlane.xlu0 %1540
      %v1542 = vsel %vm1514, %v1534, 0.0
      %1543 = vadd.xlane.f32.xlu0 %v1542
      %v1544 = vpop.xlane.xlu0 %1543
      %v1545 = vsel %vm1514, %v1536, 0.0
      %1546 = vadd.xlane.f32.xlu0 %v1545
      %v1547 = vpop.xlane.xlu0 %1546
      %v1548 = vsel %vm1514, %v1538, 0.0
      %1549 = vadd.xlane.f32.xlu0 %v1548
      %v1550 = vpop.xlane.xlu0 %1549
      %v1551 = vrcp.pop %v1541
      %v1552 = vrcp.pop %v1544
      %v1553 = vrcp.pop %v1547
      %v1554 = vrcp.pop %v1550
      %v1555 = vmul.f32 %v1532, %v1551
      %v1556 = vmul.f32 %v1534, %v1552
      %v1557 = vmul.f32 %v1536, %v1553
      %v1558 = vmul.f32 %v1538, %v1554
      %v1559 = vpack.c.bf16 %v1555, %v1555
      %v1560 = vpack.c.bf16 %v1556, %v1556
      %v1561 = vpack.c.bf16 %v1557, %v1557
      %v1562 = vpack.c.bf16 %v1558, %v1558
      %v1563 = vpack.c.bf16 %v1384, %v1384
      %v1564 = vpack.c.bf16 %v1386, %v1386
      %v1565 = vpack.c.bf16 %v1422, %v1422
      %v1566 = vpack.c.bf16 %v1424, %v1424
      %v1568 = vsel %vm1514, %v1559, 0
      %vm1570 = vcmask 1043456
      %v1572 = vsel %vm1570, %v1563, 0
      %1574 = vmatpush.bf16.msra.mxu0 0
      %1575 = vmatpush.bf16.msra.mxu0 0
      %1576 = vmatpush.bf16.msra.mxu0 0
      %1577 = vmatpush.bf16.msra.mxu0 0
      %1578 = vmatpush.bf16.msra.mxu0 0
      %1579 = vmatpush.bf16.msra.mxu0 0
      %1580 = vmatpush.bf16.msra.mxu0 0
      %1581 = vmatpush.bf16.msra.mxu0 %v1572
      %1582 = vmatmul.bf16.gmra.mxu0 %v1568
      %v1583 = vpop.f32.mrf.mxu0
      %v1584 = vadd.f32 0.0, %v1583
      %v1585 = vpop.f32.mrf.mxu0
      %1586 = vdwg.mxu0
      %v1588 = vsel %vm1514, %v1560, 0
      %v1591 = vsel %vm1570, %v1564, 0
      %1593 = vmatpush.bf16.msra.mxu0 0
      %1594 = vmatpush.bf16.msra.mxu0 0
      %1595 = vmatpush.bf16.msra.mxu0 0
      %1596 = vmatpush.bf16.msra.mxu0 0
      %1597 = vmatpush.bf16.msra.mxu0 0
      %1598 = vmatpush.bf16.msra.mxu0 0
      %1599 = vmatpush.bf16.msra.mxu0 0
      %1600 = vmatpush.bf16.msra.mxu0 %v1591
      %1601 = vmatmul.bf16.gmra.mxu0 %v1588
      %v1602 = vpop.f32.mrf.mxu0
      %v1603 = vadd.f32 0.0, %v1602
      %v1604 = vpop.f32.mrf.mxu0
      %1605 = vdwg.mxu0
      %v1607 = vsel %vm1514, %v1561, 0
      %v1610 = vsel %vm1570, %v1565, 0
      %1612 = vmatpush.bf16.msra.mxu0 0
      %1613 = vmatpush.bf16.msra.mxu0 0
      %1614 = vmatpush.bf16.msra.mxu0 0
      %1615 = vmatpush.bf16.msra.mxu0 0
      %1616 = vmatpush.bf16.msra.mxu0 0
      %1617 = vmatpush.bf16.msra.mxu0 0
      %1618 = vmatpush.bf16.msra.mxu0 0
      %1619 = vmatpush.bf16.msra.mxu0 %v1610
      %1620 = vmatmul.bf16.gmra.mxu0 %v1607
      %v1621 = vpop.f32.mrf.mxu0
      %v1622 = vadd.f32 0.0, %v1621
      %v1623 = vpop.f32.mrf.mxu0
      %1624 = vdwg.mxu0
      %v1626 = vsel %vm1514, %v1562, 0
      %v1629 = vsel %vm1570, %v1566, 0
      %1631 = vmatpush.bf16.msra.mxu0 0
      %1632 = vmatpush.bf16.msra.mxu0 0
      %1633 = vmatpush.bf16.msra.mxu0 0
      %1634 = vmatpush.bf16.msra.mxu0 0
      %1635 = vmatpush.bf16.msra.mxu0 0
      %1636 = vmatpush.bf16.msra.mxu0 0
      %1637 = vmatpush.bf16.msra.mxu0 0
      %1638 = vmatpush.bf16.msra.mxu0 %v1629
      %1639 = vmatmul.bf16.gmra.mxu0 %v1626
      %v1640 = vpop.f32.mrf.mxu0
      %v1641 = vadd.f32 0.0, %v1640
      %v1642 = vpop.f32.mrf.mxu0
      %1643 = vdwg.mxu0
      %v1644 = vrot.slane %v1584, 4
      %v1645 = vsel %vm861, 0.0, %v1644
      %v1647 = vunpack.c.l.s4 1983009808
      %v1648 = vunpack.c.0.s8 %v1647
      %v1649 = vperm.slane %v1584, %v1648
      %v1651 = vunpack.c.l.s4 1983009808
      %v1652 = vunpack.c.0.s8 %v1651
      %v1653 = vperm.slane %v1645, %v1652
      %v1654 = vrot.slane %v1603, 4
      %v1655 = vsel %vm861, 0.0, %v1654
      %v1657 = vunpack.c.l.s4 1983009808
      %v1658 = vunpack.c.0.s8 %v1657
      %v1659 = vperm.slane %v1603, %v1658
      %v1661 = vunpack.c.l.s4 1983009808
      %v1662 = vunpack.c.0.s8 %v1661
      %v1663 = vperm.slane %v1655, %v1662
      %v1664 = vrot.slane %v1659, 4
      %v1665 = vsel %vm861, %v1664, %v1649
      %v1666 = vrot.slane %v1649, 4
      %v1667 = vsel %vm861, %v1659, %v1666
      %v1669 = vunpack.c.l.s4 1934713408
      %v1670 = vunpack.c.0.s8 %v1669
      %v1671 = vperm.slane %v1665, %v1670
      %v1673 = vunpack.c.l.s4 1934713408
      %v1674 = vunpack.c.0.s8 %v1673
      %v1675 = vperm.slane %v1667, %v1674
      %v1676 = vrot.slane %v1663, 4
      %v1677 = vsel %vm861, %v1676, %v1653
      %v1678 = vrot.slane %v1653, 4
      %v1679 = vsel %vm861, %v1663, %v1678
      %v1681 = vunpack.c.l.s4 1934713408
      %v1682 = vunpack.c.0.s8 %v1681
      %v1683 = vperm.slane %v1677, %v1682
      %v1685 = vunpack.c.l.s4 1934713408
      %v1686 = vunpack.c.0.s8 %v1685
      %v1687 = vperm.slane %v1679, %v1686
      %v1688 = vrot.slane %v1671, 4
      %v1689 = vsel %vm861, 0.0, %v1688
      %v1690 = vrot.slane %v1675, 4
      %v1691 = vsel %vm861, 0.0, %v1690
      %v1692 = vrot.slane %v1683, 4
      %v1693 = vsel %vm861, 0.0, %v1692
      %v1694 = vrot.slane %v1687, 4
      %v1695 = vsel %vm861, 0.0, %v1694
      %v1696 = vrot.slane %v1622, 4
      %v1697 = vsel %vm861, 0.0, %v1696
      %v1699 = vunpack.c.l.s4 1983009808
      %v1700 = vunpack.c.0.s8 %v1699
      %v1701 = vperm.slane %v1622, %v1700
      %v1703 = vunpack.c.l.s4 1983009808
      %v1704 = vunpack.c.0.s8 %v1703
      %v1705 = vperm.slane %v1697, %v1704
      %v1706 = vrot.slane %v1641, 4
      %v1707 = vsel %vm861, 0.0, %v1706
      %v1709 = vunpack.c.l.s4 1983009808
      %v1710 = vunpack.c.0.s8 %v1709
      %v1711 = vperm.slane %v1641, %v1710
      %v1713 = vunpack.c.l.s4 1983009808
      %v1714 = vunpack.c.0.s8 %v1713
      %v1715 = vperm.slane %v1707, %v1714
      %v1716 = vrot.slane %v1711, 4
      %v1717 = vsel %vm861, %v1716, %v1701
      %v1718 = vrot.slane %v1701, 4
      %v1719 = vsel %vm861, %v1711, %v1718
      %v1721 = vunpack.c.l.s4 1934713408
      %v1722 = vunpack.c.0.s8 %v1721
      %v1723 = vperm.slane %v1717, %v1722
      %v1725 = vunpack.c.l.s4 1934713408
      %v1726 = vunpack.c.0.s8 %v1725
      %v1727 = vperm.slane %v1719, %v1726
      %v1728 = vrot.slane %v1715, 4
      %v1729 = vsel %vm861, %v1728, %v1705
      %v1730 = vrot.slane %v1705, 4
      %v1731 = vsel %vm861, %v1715, %v1730
      %v1733 = vunpack.c.l.s4 1934713408
      %v1734 = vunpack.c.0.s8 %v1733
      %v1735 = vperm.slane %v1729, %v1734
      %v1737 = vunpack.c.l.s4 1934713408
      %v1738 = vunpack.c.0.s8 %v1737
      %v1739 = vperm.slane %v1731, %v1738
      %v1740 = vrot.slane %v1723, 4
      %v1741 = vsel %vm861, 0.0, %v1740
      %v1742 = vrot.slane %v1727, 4
      %v1743 = vsel %vm861, 0.0, %v1742
      %v1744 = vrot.slane %v1735, 4
      %v1745 = vsel %vm861, 0.0, %v1744
      %v1746 = vrot.slane %v1739, 4
      %v1747 = vsel %vm861, 0.0, %v1746
      %v1748 = vsel %vm861, %v1690, %v1671
      %v1750 = vunpack.c.l.s4 1983009808
      %v1751 = vunpack.c.0.s8 %v1750
      %v1752 = vperm.slane %v1748, %v1751
      %v1753 = vrot.slane %v1691, 4
      %v1754 = vsel %vm861, %v1753, %v1689
      %v1756 = vunpack.c.l.s4 1983009808
      %v1757 = vunpack.c.0.s8 %v1756
      %v1758 = vperm.slane %v1754, %v1757
      %v1759 = vsel %vm861, %v1694, %v1683
      %v1761 = vunpack.c.l.s4 1983009808
      %v1762 = vunpack.c.0.s8 %v1761
      %v1763 = vperm.slane %v1759, %v1762
      %v1764 = vrot.slane %v1695, 4
      %v1765 = vsel %vm861, %v1764, %v1693
      %v1767 = vunpack.c.l.s4 1983009808
      %v1768 = vunpack.c.0.s8 %v1767
      %v1769 = vperm.slane %v1765, %v1768
      %v1770 = vrot.slane %v1758, 4
      %v1771 = vsel %vm861, %v1770, %v1752
      %v1773 = vunpack.c.l.s4 1934713408
      %v1774 = vunpack.c.0.s8 %v1773
      %v1775 = vperm.slane %v1771, %v1774
      %v1776 = vrot.slane %v1769, 4
      %v1777 = vsel %vm861, %v1776, %v1763
      %v1779 = vunpack.c.l.s4 1934713408
      %v1780 = vunpack.c.0.s8 %v1779
      %v1781 = vperm.slane %v1777, %v1780
      %v1782 = vrot.slane %v1781, 4
      %v1783 = vsel %vm861, %v1782, %v1775
      %v1784 = vrot.slane %v1775, 4
      %v1785 = vsel %vm861, %v1781, %v1784
      %v1786 = vsel %vm861, %v1742, %v1723
      %v1788 = vunpack.c.l.s4 1983009808
      %v1789 = vunpack.c.0.s8 %v1788
      %v1790 = vperm.slane %v1786, %v1789
      %v1791 = vrot.slane %v1743, 4
      %v1792 = vsel %vm861, %v1791, %v1741
      %v1794 = vunpack.c.l.s4 1983009808
      %v1795 = vunpack.c.0.s8 %v1794
      %v1796 = vperm.slane %v1792, %v1795
      %v1797 = vsel %vm861, %v1746, %v1735
      %v1799 = vunpack.c.l.s4 1983009808
      %v1800 = vunpack.c.0.s8 %v1799
      %v1801 = vperm.slane %v1797, %v1800
      %v1802 = vrot.slane %v1747, 4
      %v1803 = vsel %vm861, %v1802, %v1745
      %v1805 = vunpack.c.l.s4 1983009808
      %v1806 = vunpack.c.0.s8 %v1805
      %v1807 = vperm.slane %v1803, %v1806
      %v1808 = vrot.slane %v1796, 4
      %v1809 = vsel %vm861, %v1808, %v1790
      %v1811 = vunpack.c.l.s4 1934713408
      %v1812 = vunpack.c.0.s8 %v1811
      %v1813 = vperm.slane %v1809, %v1812
      %v1814 = vrot.slane %v1807, 4
      %v1815 = vsel %vm861, %v1814, %v1801
      %v1817 = vunpack.c.l.s4 1934713408
      %v1818 = vunpack.c.0.s8 %v1817
      %v1819 = vperm.slane %v1815, %v1818
      %v1820 = vrot.slane %v1819, 4
      %v1821 = vsel %vm861, %v1820, %v1813
      %v1822 = vrot.slane %v1813, 4
      %v1823 = vsel %vm861, %v1819, %v1822
      %1826 = vrot.lane.b32.xlu0 %v1785, 16
      %v1827 = vpop.permute.xlu0 %1826
      %1828 = vrot.lane.b32.xlu0 %v1823, 16
      %v1829 = vpop.permute.xlu0 %1828
      %v1832 = vsel %vm1437, %v1783, %v1827
      %v1833 = vsel %vm1437, %v1821, %v1829
      %v1834 = vpack.c.bf16 %v1833, %v1832
      %v1835 = vld [vmem:[%s701] sm:$0xf]
      %v1836 = vld [vmem:[%s701 + $0x4] sm:$0xf]
      %v1837 = vld [vmem:[%s701 + $0x8] sm:$0xf]
      %v1838 = vld [vmem:[%s701 + $0xc] sm:$0xf]
      %v1839 = vld [vmem:[%s704] sm:$0x1]
      %v1841 = vperm.slane %v1839, 0
      %v1847 = vunpack.c.l.b16 %v1835
      %v1848 = vunpack.c.l.b16 %v1836
      %v1849 = vunpack.c.l.b16 %v1837
      %v1850 = vunpack.c.l.b16 %v1838
      %v1851 = vpack.c.b16 %v1848, %v1847
      %v1852 = vpack.c.b16 %v1850, %v1849
      %v1856 = vsel %vm834, %v1834, 0
      %1858 = vmatpush.bf16.msra.mxu0 0
      %1859 = vmatpush.bf16.msra.mxu0 0
      %1860 = vmatpush.bf16.msra.mxu0 0
      %1861 = vmatpush.bf16.msra.mxu0 0
      %1862 = vmatpush.bf16.msra.mxu0 0
      %1863 = vmatpush.bf16.msra.mxu0 0
      %1864 = vmatpush.bf16.msra.mxu0 %v1852
      %1865 = vmatpush.bf16.msra.mxu0 %v1851
      %1866 = vmatmul.bf16.gmra.mxu0 %v1856
      %v1867 = vpop.f32.mrf.mxu0
      %v1868 = vadd.f32 %v1841, %v1867
      %v1869 = vpop.f32.mrf.mxu0
      %v1870 = vadd.f32 %v1841, %v1869
      %1871 = vdwg.mxu0
      %v1872 = vadd.f32 %v1868, %v806
      %v1873 = vadd.f32 %v1870, %v807
      %v1874 = vld [vmem:[%s707] sm:$0x1]
      %v1875 = vld [vmem:[%s710] sm:$0x1]
      %v1876 = vsel %vm834, %v1872, 0.0
      %1877 = vadd.xlane.f32.xlu0 %v1876
      %v1878 = vpop.xlane.xlu0 %1877
      %v1879 = vsel %vm834, %v1873, 0.0
      %1880 = vadd.xlane.f32.xlu0 %v1879
      %v1881 = vpop.xlane.xlu0 %1880
      %v1882 = vrcp.pop 32.0
      %v1883 = vmul.f32 32.0, %v1882
      %v1884 = vsub.f32 1.0, %v1883
      %v1885 = vmul.f32 %v1882, %v1884
      %v1886 = vadd.f32 %v1882, %v1885
      %vm1887 = vweird.f32 %v1882
      %v1888 = vsel %vm1887, %v1882, %v1886
      %v1889 = vmul.f32 %v1878, %v1888
      %v1890 = vmul.f32 %v1881, %v1888
      %v1891 = vsub.f32 %v1872, %v1889
      %v1892 = vsub.f32 %v1873, %v1890
      %v1893 = vmul.f32 %v1891, %v1891
      %v1894 = vmul.f32 %v1892, %v1892
      %v1895 = vsel %vm834, %v1893, 0.0
      %1896 = vadd.xlane.f32.xlu0 %v1895
      %v1897 = vpop.xlane.xlu0 %1896
      %v1898 = vsel %vm834, %v1894, 0.0
      %1899 = vadd.xlane.f32.xlu0 %v1898
      %v1900 = vpop.xlane.xlu0 %1899
      %v1901 = vmul.f32 %v1897, %v1888
      %v1902 = vmul.f32 %v1900, %v1888
      %v1903 = vadd.f32 %v1901, 1e-12
      %v1904 = vadd.f32 %v1902, 1e-12
      %v1905 = vrsqrt.pop %v1903
      %v1906 = vmul.f32 %v1905, %v1903
      %v1907 = vmul.f32 %v1906, %v1905
      %v1908 = vmul.f32 0.5, %v1907
      %v1909 = vsub.f32 1.5, %v1908
      %v1910 = vmul.f32 %v1905, %v1909
      %vm1911 = vweird.f32 %v1903
      %vm1912 = vweird.f32 %v1905
      %vm1913 = vmor %vm1911, %vm1912
      %v1914 = vsel %vm1913, %v1905, %v1910
      %v1915 = vrsqrt.pop %v1904
      %v1916 = vmul.f32 %v1915, %v1904
      %v1917 = vmul.f32 %v1916, %v1915
      %v1918 = vmul.f32 0.5, %v1917
      %v1919 = vsub.f32 1.5, %v1918
      %v1920 = vmul.f32 %v1915, %v1919
      %vm1921 = vweird.f32 %v1904
      %vm1922 = vweird.f32 %v1915
      %vm1923 = vmor %vm1921, %vm1922
      %v1924 = vsel %vm1923, %v1915, %v1920
      %v1925 = vmul.f32 %v1891, %v1914
      %v1926 = vmul.f32 %v1892, %v1924
      %v1928 = vperm.slane %v1874, 0
      %v1930 = vmul.f32 %v1925, %v1928
      %v1931 = vmul.f32 %v1926, %v1928
      %v1933 = vperm.slane %v1875, 0
      %v1935 = vadd.f32 %v1930, %v1933
      %v1936 = vadd.f32 %v1931, %v1933
      %v1937 = vpack.c.bf16 %v1936, %v1935
      %v1938 = vld [vmem:[%s715] sm:$0xf]
      %v1939 = vld [vmem:[%s715 + $0x4] sm:$0xf]
      %v1940 = vld [vmem:[%s715 + $0x8] sm:$0xf]
      %v1941 = vld [vmem:[%s715 + $0xc] sm:$0xf]
      %v1942 = vld [vmem:[%s718] sm:$0x1]
      %v1944 = vperm.slane %v1942, 0
      %v1950 = vunpack.c.l.b16 %v1938
      %v1951 = vunpack.c.l.b16 %v1939
      %v1952 = vunpack.c.l.b16 %v1940
      %v1953 = vunpack.c.l.b16 %v1941
      %v1954 = vpack.c.b16 %v1951, %v1950
      %v1955 = vpack.c.b16 %v1953, %v1952
      %v1959 = vsel %vm834, %v1937, 0
      %1961 = vmatpush.bf16.msra.mxu0 0
      %1962 = vmatpush.bf16.msra.mxu0 0
      %1963 = vmatpush.bf16.msra.mxu0 0
      %1964 = vmatpush.bf16.msra.mxu0 0
      %1965 = vmatpush.bf16.msra.mxu0 0
      %1966 = vmatpush.bf16.msra.mxu0 0
      %1967 = vmatpush.bf16.msra.mxu0 %v1955
      %1968 = vmatpush.bf16.msra.mxu0 %v1954
      %1969 = vmatmul.bf16.gmra.mxu0 %v1959
      %v1970 = vpop.f32.mrf.mxu0
      %v1971 = vadd.f32 %v1944, %v1970
      %v1972 = vpop.f32.mrf.mxu0
      %v1973 = vadd.f32 %v1944, %v1972
      %1974 = vdwg.mxu0
      %v1975 = vmul.f32 %v1971, %v1971
      %v1976 = vmul.f32 %v1973, %v1973
      %v1977 = vmul.f32 %v1971, %v1975
      %v1978 = vmul.f32 %v1973, %v1976
      %v1979 = vmul.f32 %v1977, 0.044715
      %v1980 = vmul.f32 %v1978, 0.044715
      %v1981 = vadd.f32 %v1971, %v1979
      %v1982 = vadd.f32 %v1973, %v1980
      %v1983 = vmul.f32 %v1981, 0.7978846
      %v1984 = vmul.f32 %v1982, 0.7978846
      %v1985 = vtanh.pop %v1983
      %v1986 = vtanh.pop %v1984
      %v1987 = vadd.f32 %v1985, 1.0
      %v1988 = vadd.f32 %v1986, 1.0
      %v1989 = vmul.f32 %v1987, 0.5
      %v1990 = vmul.f32 %v1988, 0.5
      %v1991 = vmul.f32 %v1971, %v1989
      %v1992 = vmul.f32 %v1973, %v1990
      %v1993 = vpack.c.bf16 %v1992, %v1991
      %v1994 = vld [vmem:[%s723] sm:$0xf]
      %v1995 = vld [vmem:[%s723 + $0x4] sm:$0xf]
      %v1996 = vld [vmem:[%s723 + $0x8] sm:$0xf]
      %v1997 = vld [vmem:[%s723 + $0xc] sm:$0xf]
      %v1998 = vld [vmem:[%s723 + $0x10] sm:$0xf]
      %v1999 = vld [vmem:[%s723 + $0x14] sm:$0xf]
      %v2000 = vld [vmem:[%s723 + $0x18] sm:$0xf]
      %v2001 = vld [vmem:[%s723 + $0x1c] sm:$0xf]
      %v2002 = vld [vmem:[%s726] sm:$0x1]
      %v2004 = vperm.slane %v2002, 0
      %v2014 = vunpack.c.l.b16 %v1994
      %v2015 = vunpack.c.l.b16 %v1995
      %v2016 = vunpack.c.l.b16 %v1996
      %v2017 = vunpack.c.l.b16 %v1997
      %v2018 = vunpack.c.l.b16 %v1998
      %v2019 = vunpack.c.l.b16 %v1999
      %v2020 = vunpack.c.l.b16 %v2000
      %v2021 = vunpack.c.l.b16 %v2001
      %v2022 = vpack.c.b16 %v2015, %v2014
      %v2023 = vpack.c.b16 %v2017, %v2016
      %v2024 = vpack.c.b16 %v2019, %v2018
      %v2025 = vpack.c.b16 %v2021, %v2020
      %vm2030 = vcmask 523264
      %v2032 = vsel %vm2030, %v1993, 0
      %2034 = vmatpush.bf16.msra.mxu0 0
      %2035 = vmatpush.bf16.msra.mxu0 0
      %2036 = vmatpush.bf16.msra.mxu0 0
      %2037 = vmatpush.bf16.msra.mxu0 0
      %2038 = vmatpush.bf16.msra.mxu0 %v2025
      %2039 = vmatpush.bf16.msra.mxu0 %v2024
      %2040 = vmatpush.bf16.msra.mxu0 %v2023
      %2041 = vmatpush.bf16.msra.mxu0 %v2022
      %2042 = vmatmul.bf16.gmra.mxu0 %v2032
      %v2043 = vpop.f32.mrf.mxu0
      %v2044 = vadd.f32 %v2004, %v2043
      %v2045 = vpop.f32.mrf.mxu0
      %v2046 = vadd.f32 %v2004, %v2045
      %2047 = vdwg.mxu0
      %v2048 = vadd.f32 %v2044, %v1935
      %v2049 = vadd.f32 %v2046, %v1936
      %v2050 = vld [vmem:[%s729] sm:$0x1]
      %v2051 = vld [vmem:[%s732] sm:$0x1]
      %v2052 = vsel %vm834, %v2048, 0.0
      %2053 = vadd.xlane.f32.xlu0 %v2052
      %v2054 = vpop.xlane.xlu0 %2053
      %v2055 = vsel %vm834, %v2049, 0.0
      %2056 = vadd.xlane.f32.xlu0 %v2055
      %v2057 = vpop.xlane.xlu0 %2056
      %v2058 = vmul.f32 %v2054, %v1888
      %v2059 = vmul.f32 %v2057, %v1888
      %v2060 = vsub.f32 %v2048, %v2058
      %v2061 = vsub.f32 %v2049, %v2059
      %v2062 = vmul.f32 %v2060, %v2060
      %v2063 = vmul.f32 %v2061, %v2061
      %v2064 = vsel %vm834, %v2062, 0.0
      %2065 = vadd.xlane.f32.xlu0 %v2064
      %v2066 = vpop.xlane.xlu0 %2065
      %v2067 = vsel %vm834, %v2063, 0.0
      %2068 = vadd.xlane.f32.xlu0 %v2067
      %v2069 = vpop.xlane.xlu0 %2068
      %v2070 = vmul.f32 %v2066, %v1888
      %v2071 = vmul.f32 %v2069, %v1888
      %v2072 = vadd.f32 %v2070, 1e-12
      %v2073 = vadd.f32 %v2071, 1e-12
      %v2074 = vrsqrt.pop %v2072
      %v2075 = vmul.f32 %v2074, %v2072
      %v2076 = vmul.f32 %v2075, %v2074
      %v2077 = vmul.f32 0.5, %v2076
      %v2078 = vsub.f32 1.5, %v2077
      %v2079 = vmul.f32 %v2074, %v2078
      %vm2080 = vweird.f32 %v2072
      %vm2081 = vweird.f32 %v2074
      %vm2082 = vmor %vm2080, %vm2081
      %v2083 = vsel %vm2082, %v2074, %v2079
      %v2084 = vrsqrt.pop %v2073
      %v2085 = vmul.f32 %v2084, %v2073
      %v2086 = vmul.f32 %v2085, %v2084
      %v2087 = vmul.f32 0.5, %v2086
      %v2088 = vsub.f32 1.5, %v2087
      %v2089 = vmul.f32 %v2084, %v2088
      %vm2090 = vweird.f32 %v2073
      %vm2091 = vweird.f32 %v2084
      %vm2092 = vmor %vm2090, %vm2091
      %v2093 = vsel %vm2092, %v2084, %v2089
      %v2094 = vmul.f32 %v2060, %v2083
      %v2095 = vmul.f32 %v2061, %v2093
      %v2097 = vperm.slane %v2050, 0
      %v2099 = vmul.f32 %v2094, %v2097
      %v2100 = vmul.f32 %v2095, %v2097
      %v2102 = vperm.slane %v2051, 0
      %v2104 = vadd.f32 %v2099, %v2102
      %v2105 = vadd.f32 %v2100, %v2102
      %2106 = vst.msk [vmem:[#allocation2] sm:$0xff] %vm834, %v2104
      %2107 = vst.msk [vmem:[#allocation2 + $0x8] sm:$0xff] %vm834, %v2105
      %p2108 = scmp.eq.s32.totalorder %s29, 1
      // Predicated region
      $region97: #{forward.1} parent=91 // pred_check
        %p2109 = pneg %p2108
      $region98: #{forward.1} parent=91 // pred_check_branch
        %2111 = sbr.rel (%p2109) target = $region100
      $region99: #{forward.1} parent=91 // pred_region
        %v2112 = vld [vmem:[%s16] sm:$0xff]
        %v2113 = vld [vmem:[%s16 + $0x8] sm:$0xff]
        %v2114 = vld [vmem:[%s16 + $0x10] sm:$0xff]
        %v2115 = vld [vmem:[%s16 + $0x18] sm:$0xff]
        %v2116 = vld [vmem:[%s17] sm:$0x1]
        %v2118 = vperm.slane %v2116, 0
        %v2121 = vsel %vm834, %v2104, 0
        %v2124 = vsel %vm834, %v2105, 0
        %2126 = vmatpush.msra.mxu0 0.0
        %2127 = vmatpush.msra.mxu0 0.0
        %2128 = vmatpush.msra.mxu0 0.0
        %2129 = vmatpush.msra.mxu0 0.0
        %2130 = vmatpush.msra.mxu0 0.0
        %2131 = vmatpush.msra.mxu0 0.0
        %2132 = vmatpush.msra.mxu0 0.0
        %2133 = vmatpush.msra.mxu0 0.0
        %2134 = vmatpush.msra.mxu0 0.0
        %2135 = vmatpush.msra.mxu0 0.0
        %2136 = vmatpush.msra.mxu0 0.0
        %2137 = vmatpush.msra.mxu0 0.0
        %2138 = vmatpush.msra.mxu0 %v2115
        %2139 = vmatpush.msra.mxu0 %v2114
        %2140 = vmatpush.msra.mxu0 %v2113
        %2141 = vmatpush.msra.mxu0 %v2112
        %2142 = vmatmul.f32.gmra.mxu0 %v2121
        %v2143 = vpop.f32.mrf.mxu0
        %v2144 = vadd.f32 %v2118, %v2143
        %2145 = vmatmul.f32.gmra.mxu0 %v2124
        %v2146 = vpop.f32.mrf.mxu0
        %v2147 = vadd.f32 %v2118, %v2146
        %2148 = vdwg.mxu0
        %2149 = vst [vmem:[%s18] sm:$0xff] %v2144
        %2150 = vst [vmem:[%s18 + $0x8] sm:$0xff] %v2147
      $region100: #{forward.1} parent=91 // pred_fallthru
        _
      // Predicated region
      $region101: #{forward.1} parent=91 // pred_check
        %p2151 = pneg %p480
      $region102: #{forward.1} parent=91 // pred_check_branch
        %2153 = sbr.rel (%p2151) target = $region104
      $region103: #{forward.1} parent=91 // pred_region
        _
      $region104: #{forward.1} parent=91 // pred_fallthru
        _
      // Predicated region
      $region105: #{forward.1} parent=91 // pred_check
        %p2154 = pneg %p480
      $region106: #{forward.1} parent=91 // pred_check_branch
        %2156 = sbr.rel (%p2154) target = $region108
      $region107: #{forward.1} parent=91 // pred_region
        _
      $region108: #{forward.1} parent=91 // pred_fallthru
        _
    $region92: #{forward.1} parent=5 // pred_fallthru
      _
    %p2157 = scmp.le.s32.totalorder 2, %s24
    // Predicated region
    $region109: #{forward.1} parent=5 // pred_check
      %p2158 = pneg %p2157
    $region110: #{forward.1} parent=5 // pred_check_branch
      %2160 = sbr.rel (%p2158) target = $region112
    $region111: #{forward.1} parent=5 // pred_region
      %s2161 = ssub.s32 %s24, 2
    $region112: #{forward.1} parent=5 // pred_fallthru
      _
  $region6: #{forward.1} parent=0 // loop_footer
    %s28 = sadd.s32 1, %s24
  $region7: #{forward.1} parent=0 // loop_footer_branch
    %23 = sbr.rel target = $region3
  $region8: #{forward.1} parent=0 // loop_exit
    _

</llo_original>
